<compile_context>
chip_gen: v7x
topology: tpu7x:2x2x1
jax: 0.10.0
libtpu: 0.0.40
codegen_flags: <defaults>
</compile_context>

<pallas_src>
import jax
import jax.numpy as jnp
from jax.experimental import pallas as pl
from jax.experimental.pallas import tpu as pltpu


def _round_up(x, m):
    return ((x + m - 1) // m) * m


# ----------------------------------------------------------------------------
# Kernel
# ----------------------------------------------------------------------------
def _ffae_kernel(x_ref,
                 w1_ref, b1_ref, w2_ref, b2_ref, w3_ref, b3_ref,
                 w4_ref, b4_ref, w5_ref, b5_ref, w6_ref, b6_ref,
                 o_ref):
    """Fused 6-layer MLP autoencoder forward for one (bt, d_in) batch tile."""

    def dense(h_bf16, w_ref, b_ref):
        # bf16 operands into the MXU, f32 accumulate, f32 bias add on the VPU.
        return (jnp.dot(h_bf16, w_ref[...], preferred_element_type=jnp.float32)
                + b_ref[...])

    def relu_bf16(z_f32):
        return jnp.maximum(z_f32, 0.0).astype(jnp.bfloat16)

    h = x_ref[...]                                    # bf16, no upcast needed
    # ---- encoder ----
    h = relu_bf16(dense(h, w1_ref, b1_ref))           # Linear(in, 100)   + ReLU
    h = relu_bf16(dense(h, w2_ref, b2_ref))           # Linear(100, 50)   + ReLU
    h = relu_bf16(dense(h, w3_ref, b3_ref))           # Linear(50, latent)+ ReLU
    # ---- decoder ----
    h = relu_bf16(dense(h, w4_ref, b4_ref))           # Linear(latent, 50)+ ReLU
    h = relu_bf16(dense(h, w5_ref, b5_ref))           # Linear(50, 100)   + ReLU
    z = dense(h, w6_ref, b6_ref)                      # Linear(100, in)
    # Sigmoid in EUP-friendly tanh form (mathematically identical).
    o_ref[...] = (0.5 * (jnp.tanh(0.5 * z) + 1.0)).astype(o_ref.dtype)


# ----------------------------------------------------------------------------
# Parameter preparation (call ONCE at init, not per forward)
# ----------------------------------------------------------------------------
def prepare_params(params):
    """Pad hidden dims to 128-lane multiples; keep first fan_in / last fan_out
    natural.  Weights -> bf16, biases -> f32 row vectors.  Zero padding is
    numerically inert through the zero bias columns + ReLU."""
    assert len(params) == 6, "FFAutoEncoder has 6 Linear layers"
    n = len(params)
    prepped = []
    dims = []
    for i, (w, b) in enumerate(params):
        fi, fo = w.shape
        pi = fi if i == 0 else _round_up(fi, 128)
        po = fo if i == n - 1 else _round_up(fo, 128)
        wp = jnp.zeros((pi, po), jnp.bfloat16).at[:fi, :fo].set(
            jnp.asarray(w, jnp.bfloat16))
        bp = jnp.zeros((1, po), jnp.float32).at[:, :fo].set(
            jnp.asarray(b, jnp.float32).reshape(1, fo))
        prepped.append((wp, bp))
        dims.append((pi, po))
    for i in range(n - 1):
        assert dims[i][1] == dims[i + 1][0], "layer dims do not chain"
    return tuple(prepped)


# ----------------------------------------------------------------------------
# Forward wrapper
# ----------------------------------------------------------------------------
def ff_autoencoder_forward(x, prepped_params, *, batch_tile=1024,
                           interpret=False):
    """Fused FFAutoEncoder forward.

    x: (B, input_dim) array.
    prepped_params: output of prepare_params() (6 padded (w, b) pairs).
    """
    B, d_in = x.shape
    params = prepped_params
    assert len(params) == 6
    assert params[0][0].shape[0] == d_in, "x feature dim != first layer fan_in"
    d_out = params[-1][0].shape[1]
    orig_dtype = x.dtype

    # Stream x in bf16 (matmuls are bf16 anyway; halves input HBM traffic).
    x_bf = x.astype(jnp.bfloat16)

    # --- batch tile selection -----------------------------------------------
    bt = max(8, _round_up(min(batch_tile, max(B, 1)), 8))
    if B > 8:
        # >= 2 grid steps so both v7x TensorCores get work.
        bt = min(bt, _round_up(pl.cdiv(B, 2), 8))
    bt = min(bt, 4096)            # keeps double-buffered I/O + acts << 64 MiB
    grid = (pl.cdiv(B, bt),)      # ragged last block handled by Pallas masking

    # --- specs ---------------------------------------------------------------
    in_specs = [pl.BlockSpec((bt, d_in), lambda i: (i, 0))]
    flat_args = [x_bf]
    for (wp, bp) in params:
        in_specs.append(pl.BlockSpec(wp.shape, lambda i: (0, 0)))
        in_specs.append(pl.BlockSpec(bp.shape, lambda i: (0, 0)))
        flat_args.extend([wp, bp])
    out_spec = pl.BlockSpec((bt, d_out), lambda i: (i, 0))

    # --- cost estimate + VMEM budget (scaled with bt; v7x-safe) --------------
    w_bytes = sum(wp.size * wp.dtype.itemsize + bp.size * bp.dtype.itemsize
                  for wp, bp in params)
    flops = 2 * B * sum(wp.shape[0] * wp.shape[1] for wp, _ in params)
    transcendentals = B * d_out                       # final sigmoid/tanh
    bytes_accessed = B * (d_in + d_out) * 2 + w_bytes
    cost = pl.CostEstimate(flops=flops,
                           transcendentals=transcendentals,
                           bytes_accessed=bytes_accessed)

    vmem_est = (2 * bt * (d_in + d_out) * 2   # double-buffered bf16 x/out tiles
                + 2 * w_bytes                 # pipelined weights + biases
                + 7 * bt * 128 * 4)           # live f32 intermediate activations
    vmem_limit = int(min(max(2 * vmem_est, 16 << 20), 56 << 20))

    out = pl.pallas_call(
        _ffae_kernel,
        out_shape=jax.ShapeDtypeStruct((B, d_out), jnp.bfloat16),
        grid_spec=pltpu.PrefetchScalarGridSpec(
            num_scalar_prefetch=0,
            grid=grid,
            in_specs=in_specs,
            out_specs=out_spec,
        ),
        compiler_params=pltpu.CompilerParams(
            dimension_semantics=("parallel",),
            vmem_limit_bytes=vmem_limit,
        ),
        cost_estimate=cost,
        interpret=interpret,
    )(*flat_args)

    return out.astype(orig_dtype)


# ----------------------------------------------------------------------------
# Init + reference
# ----------------------------------------------------------------------------
def init_params(key, input_dim, latent_dim):
    """Deterministic init mirroring nn.Linear, stored as (fan_in, fan_out)."""
    dims = [(input_dim, 100), (100, 50), (50, latent_dim),
            (latent_dim, 50), (50, 100), (100, input_dim)]
    params = []
    for (fan_in, fan_out) in dims:
        key, kw, kb = jax.random.split(key, 3)
        bound = 1.0 / jnp.sqrt(jnp.float32(fan_in))
        w = jax.random.uniform(kw, (fan_in, fan_out), jnp.float32, -bound, bound)
        b = jax.random.uniform(kb, (1, fan_out), jnp.float32, -bound, bound)
        params.append((w, b))
    return params


def reference_forward(x, params):
    """Pure-JAX reference using the same bf16-matmul / f32-accumulate recipe."""
    h = x.astype(jnp.float32)
    for i, (w, b) in enumerate(params):
        h = jnp.dot(h.astype(jnp.bfloat16), w.astype(jnp.bfloat16),
                    preferred_element_type=jnp.float32)
        h = h + b.astype(jnp.float32).reshape(1, -1)
        if i < 5:
            h = jnp.maximum(h, 0.0)
        else:
            h = jax.nn.sigmoid(h)
    return h


if __name__ == "__main__":
    input_dim = 64
    latent_dim = 16
    batch = 50          # not a multiple of the tile -> exercises ragged block

    key = jax.random.PRNGKey(0)
    key, kx = jax.random.split(key)
    x = jax.random.uniform(kx, (batch, input_dim), jnp.float32)

    raw_params = init_params(key, input_dim, latent_dim)
    prepped = prepare_params(raw_params)      # one-time padding at init

    out = ff_autoencoder_forward(x, prepped)  # default batch_tile=1024
    out = jax.block_until_ready(out)

    ref = reference_forward(x, raw_params)
    assert out.shape == (batch, input_dim)
    assert bool(jnp.all(jnp.isfinite(out)))
    assert jnp.allclose(out, ref, atol=2e-2, rtol=5e-2), "mismatch vs reference"

    print("KERNEL_OK")
</pallas_src>

<mosaic_0001>
module attributes {stable_mosaic.version = 11 : i64} {
  func.func @_ffae_kernel(%arg0: i32, %arg1: memref<32x64xbf16, #tpu.memory_space<vmem>>, %arg2: memref<64x128xbf16, #tpu.memory_space<vmem>>, %arg3: memref<1x128xf32, #tpu.memory_space<vmem>>, %arg4: memref<128x128xbf16, #tpu.memory_space<vmem>>, %arg5: memref<1x128xf32, #tpu.memory_space<vmem>>, %arg6: memref<128x128xbf16, #tpu.memory_space<vmem>>, %arg7: memref<1x128xf32, #tpu.memory_space<vmem>>, %arg8: memref<128x128xbf16, #tpu.memory_space<vmem>>, %arg9: memref<1x128xf32, #tpu.memory_space<vmem>>, %arg10: memref<128x128xbf16, #tpu.memory_space<vmem>>, %arg11: memref<1x128xf32, #tpu.memory_space<vmem>>, %arg12: memref<128x64xbf16, #tpu.memory_space<vmem>>, %arg13: memref<1x64xf32, #tpu.memory_space<vmem>>, %arg14: memref<32x64xbf16, #tpu.memory_space<vmem>>) attributes {dimension_semantics = [#tpu.dimension_semantics<parallel>], iteration_bounds = array<i64: 2>, scalar_prefetch = 0 : i64, scratch_operands = 0 : i64, tpu.core_type = #tpu.core_type<tc>, window_params = [{transform_indices = @transform_0, window_bounds = array<i64: 32, 64>}, {pipeline_mode = #tpu.pipeline_mode<synchronous>, transform_indices = @transform_1, window_bounds = array<i64: 64, 128>}, {pipeline_mode = #tpu.pipeline_mode<synchronous>, transform_indices = @transform_2, window_bounds = array<i64: 1, 128>}, {pipeline_mode = #tpu.pipeline_mode<synchronous>, transform_indices = @transform_3, window_bounds = array<i64: 128, 128>}, {pipeline_mode = #tpu.pipeline_mode<synchronous>, transform_indices = @transform_4, window_bounds = array<i64: 1, 128>}, {pipeline_mode = #tpu.pipeline_mode<synchronous>, transform_indices = @transform_5, window_bounds = array<i64: 128, 128>}, {pipeline_mode = #tpu.pipeline_mode<synchronous>, transform_indices = @transform_6, window_bounds = array<i64: 1, 128>}, {pipeline_mode = #tpu.pipeline_mode<synchronous>, transform_indices = @transform_7, window_bounds = array<i64: 128, 128>}, {pipeline_mode = #tpu.pipeline_mode<synchronous>, transform_indices = @transform_8, window_bounds = array<i64: 1, 128>}, {pipeline_mode = #tpu.pipeline_mode<synchronous>, transform_indices = @transform_9, window_bounds = array<i64: 128, 128>}, {pipeline_mode = #tpu.pipeline_mode<synchronous>, transform_indices = @transform_10, window_bounds = array<i64: 1, 128>}, {pipeline_mode = #tpu.pipeline_mode<synchronous>, transform_indices = @transform_11, window_bounds = array<i64: 128, 64>}, {pipeline_mode = #tpu.pipeline_mode<synchronous>, transform_indices = @transform_12, window_bounds = array<i64: 1, 64>}, {transform_indices = @transform_13, window_bounds = array<i64: 32, 64>}]} {
    %c0 = arith.constant 0 : index
    %c0_0 = arith.constant 0 : index
    %0 = vector.load %arg1[%c0, %c0_0] : memref<32x64xbf16, #tpu.memory_space<vmem>>, vector<32x64xbf16>
    %c0_1 = arith.constant 0 : index
    %c0_2 = arith.constant 0 : index
    %1 = vector.load %arg2[%c0_1, %c0_2] : memref<64x128xbf16, #tpu.memory_space<vmem>>, vector<64x128xbf16>
    %cst = arith.constant dense<0.000000e+00> : vector<32x128xf32>
    %2 = tpu.matmul %0, %1, %cst {dimension_numbers = #tpu.dot_dimension_numbers<[1], [0], [0], [1], [0, 0, 1, 1], [], []>} : vector<32x64xbf16>, vector<64x128xbf16>, vector<32x128xf32> -> vector<32x128xf32>
    %c0_3 = arith.constant 0 : index
    %c0_4 = arith.constant 0 : index
    %3 = vector.load %arg3[%c0_3, %c0_4] : memref<1x128xf32, #tpu.memory_space<vmem>>, vector<1x128xf32>
    %4 = vector.broadcast %3 : vector<1x128xf32> to vector<32x128xf32>
    %5 = arith.addf %2, %4 : vector<32x128xf32>
    %cst_5 = arith.constant 0.000000e+00 : f32
    %6 = vector.broadcast %cst_5 : f32 to vector<32x128xf32>
    %7 = arith.maximumf %5, %6 : vector<32x128xf32>
    %8 = arith.truncf %7 : vector<32x128xf32> to vector<32x128xbf16>
    %c0_6 = arith.constant 0 : index
    %c0_7 = arith.constant 0 : index
    %9 = vector.load %arg4[%c0_6, %c0_7] : memref<128x128xbf16, #tpu.memory_space<vmem>>, vector<128x128xbf16>
    %cst_8 = arith.constant dense<0.000000e+00> : vector<32x128xf32>
    %10 = tpu.matmul %8, %9, %cst_8 {dimension_numbers = #tpu.dot_dimension_numbers<[1], [0], [0], [1], [0, 0, 1, 1], [], []>} : vector<32x128xbf16>, vector<128x128xbf16>, vector<32x128xf32> -> vector<32x128xf32>
    %c0_9 = arith.constant 0 : index
    %c0_10 = arith.constant 0 : index
    %11 = vector.load %arg5[%c0_9, %c0_10] : memref<1x128xf32, #tpu.memory_space<vmem>>, vector<1x128xf32>
    %12 = vector.broadcast %11 : vector<1x128xf32> to vector<32x128xf32>
    %13 = arith.addf %10, %12 : vector<32x128xf32>
    %cst_11 = arith.constant 0.000000e+00 : f32
    %14 = vector.broadcast %cst_11 : f32 to vector<32x128xf32>
    %15 = arith.maximumf %13, %14 : vector<32x128xf32>
    %16 = arith.truncf %15 : vector<32x128xf32> to vector<32x128xbf16>
    %c0_12 = arith.constant 0 : index
    %c0_13 = arith.constant 0 : index
    %17 = vector.load %arg6[%c0_12, %c0_13] : memref<128x128xbf16, #tpu.memory_space<vmem>>, vector<128x128xbf16>
    %cst_14 = arith.constant dense<0.000000e+00> : vector<32x128xf32>
    %18 = tpu.matmul %16, %17, %cst_14 {dimension_numbers = #tpu.dot_dimension_numbers<[1], [0], [0], [1], [0, 0, 1, 1], [], []>} : vector<32x128xbf16>, vector<128x128xbf16>, vector<32x128xf32> -> vector<32x128xf32>
    %c0_15 = arith.constant 0 : index
    %c0_16 = arith.constant 0 : index
    %19 = vector.load %arg7[%c0_15, %c0_16] : memref<1x128xf32, #tpu.memory_space<vmem>>, vector<1x128xf32>
    %20 = vector.broadcast %19 : vector<1x128xf32> to vector<32x128xf32>
    %21 = arith.addf %18, %20 : vector<32x128xf32>
    %cst_17 = arith.constant 0.000000e+00 : f32
    %22 = vector.broadcast %cst_17 : f32 to vector<32x128xf32>
    %23 = arith.maximumf %21, %22 : vector<32x128xf32>
    %24 = arith.truncf %23 : vector<32x128xf32> to vector<32x128xbf16>
    %c0_18 = arith.constant 0 : index
    %c0_19 = arith.constant 0 : index
    %25 = vector.load %arg8[%c0_18, %c0_19] : memref<128x128xbf16, #tpu.memory_space<vmem>>, vector<128x128xbf16>
    %cst_20 = arith.constant dense<0.000000e+00> : vector<32x128xf32>
    %26 = tpu.matmul %24, %25, %cst_20 {dimension_numbers = #tpu.dot_dimension_numbers<[1], [0], [0], [1], [0, 0, 1, 1], [], []>} : vector<32x128xbf16>, vector<128x128xbf16>, vector<32x128xf32> -> vector<32x128xf32>
    %c0_21 = arith.constant 0 : index
    %c0_22 = arith.constant 0 : index
    %27 = vector.load %arg9[%c0_21, %c0_22] : memref<1x128xf32, #tpu.memory_space<vmem>>, vector<1x128xf32>
    %28 = vector.broadcast %27 : vector<1x128xf32> to vector<32x128xf32>
    %29 = arith.addf %26, %28 : vector<32x128xf32>
    %cst_23 = arith.constant 0.000000e+00 : f32
    %30 = vector.broadcast %cst_23 : f32 to vector<32x128xf32>
    %31 = arith.maximumf %29, %30 : vector<32x128xf32>
    %32 = arith.truncf %31 : vector<32x128xf32> to vector<32x128xbf16>
    %c0_24 = arith.constant 0 : index
    %c0_25 = arith.constant 0 : index
    %33 = vector.load %arg10[%c0_24, %c0_25] : memref<128x128xbf16, #tpu.memory_space<vmem>>, vector<128x128xbf16>
    %cst_26 = arith.constant dense<0.000000e+00> : vector<32x128xf32>
    %34 = tpu.matmul %32, %33, %cst_26 {dimension_numbers = #tpu.dot_dimension_numbers<[1], [0], [0], [1], [0, 0, 1, 1], [], []>} : vector<32x128xbf16>, vector<128x128xbf16>, vector<32x128xf32> -> vector<32x128xf32>
    %c0_27 = arith.constant 0 : index
    %c0_28 = arith.constant 0 : index
    %35 = vector.load %arg11[%c0_27, %c0_28] : memref<1x128xf32, #tpu.memory_space<vmem>>, vector<1x128xf32>
    %36 = vector.broadcast %35 : vector<1x128xf32> to vector<32x128xf32>
    %37 = arith.addf %34, %36 : vector<32x128xf32>
    %cst_29 = arith.constant 0.000000e+00 : f32
    %38 = vector.broadcast %cst_29 : f32 to vector<32x128xf32>
    %39 = arith.maximumf %37, %38 : vector<32x128xf32>
    %40 = arith.truncf %39 : vector<32x128xf32> to vector<32x128xbf16>
    %c0_30 = arith.constant 0 : index
    %c0_31 = arith.constant 0 : index
    %41 = vector.load %arg12[%c0_30, %c0_31] : memref<128x64xbf16, #tpu.memory_space<vmem>>, vector<128x64xbf16>
    %cst_32 = arith.constant dense<0.000000e+00> : vector<32x64xf32>
    %42 = tpu.matmul %40, %41, %cst_32 {dimension_numbers = #tpu.dot_dimension_numbers<[1], [0], [0], [1], [0, 0, 1, 1], [], []>} : vector<32x128xbf16>, vector<128x64xbf16>, vector<32x64xf32> -> vector<32x64xf32>
    %c0_33 = arith.constant 0 : index
    %c0_34 = arith.constant 0 : index
    %43 = vector.load %arg13[%c0_33, %c0_34] : memref<1x64xf32, #tpu.memory_space<vmem>>, vector<1x64xf32>
    %44 = vector.broadcast %43 : vector<1x64xf32> to vector<32x64xf32>
    %45 = arith.addf %42, %44 : vector<32x64xf32>
    %cst_35 = arith.constant 5.000000e-01 : f32
    %46 = vector.broadcast %cst_35 : f32 to vector<32x64xf32>
    %47 = arith.mulf %46, %45 : vector<32x64xf32>
    %48 = math.tanh %47 : vector<32x64xf32>
    %cst_36 = arith.constant 1.000000e+00 : f32
    %49 = vector.broadcast %cst_36 : f32 to vector<32x64xf32>
    %50 = arith.addf %48, %49 : vector<32x64xf32>
    %cst_37 = arith.constant 5.000000e-01 : f32
    %51 = vector.broadcast %cst_37 : f32 to vector<32x64xf32>
    %52 = arith.mulf %51, %50 : vector<32x64xf32>
    %53 = arith.truncf %52 : vector<32x64xf32> to vector<32x64xbf16>
    %c0_38 = arith.constant 0 : index
    %c0_39 = arith.constant 0 : index
    %54 = vector.load %arg14[%c0_38, %c0_39] : memref<32x64xbf16, #tpu.memory_space<vmem>>, vector<32x64xbf16>
    tpu.vector_store %arg14[%c0_38, %c0_39], %53 {strides = array<i32>} : memref<32x64xbf16, #tpu.memory_space<vmem>>, vector<32x64xbf16>,
    return
  }
  func.func @transform_0(%arg0: i32) -> (i32, i32) {
    %c0_i32 = arith.constant 0 : i32
    %c0_i32_0 = arith.constant 0 : i32
    return %arg0, %c0_i32 : i32, i32
  }
  func.func @transform_1(%arg0: i32) -> (i32, i32) {
    %c0_i32 = arith.constant 0 : i32
    %c0_i32_0 = arith.constant 0 : i32
    %c0_i32_1 = arith.constant 0 : i32
    return %c0_i32, %c0_i32_0 : i32, i32
  }
  func.func @transform_2(%arg0: i32) -> (i32, i32) {
    %c0_i32 = arith.constant 0 : i32
    %c0_i32_0 = arith.constant 0 : i32
    %c0_i32_1 = arith.constant 0 : i32
    return %c0_i32, %c0_i32_0 : i32, i32
  }
  func.func @transform_3(%arg0: i32) -> (i32, i32) {
    %c0_i32 = arith.constant 0 : i32
    %c0_i32_0 = arith.constant 0 : i32
    %c0_i32_1 = arith.constant 0 : i32
    return %c0_i32, %c0_i32_0 : i32, i32
  }
  func.func @transform_4(%arg0: i32) -> (i32, i32) {
    %c0_i32 = arith.constant 0 : i32
    %c0_i32_0 = arith.constant 0 : i32
    %c0_i32_1 = arith.constant 0 : i32
    return %c0_i32, %c0_i32_0 : i32, i32
  }
  func.func @transform_5(%arg0: i32) -> (i32, i32) {
    %c0_i32 = arith.constant 0 : i32
    %c0_i32_0 = arith.constant 0 : i32
    %c0_i32_1 = arith.constant 0 : i32
    return %c0_i32, %c0_i32_0 : i32, i32
  }
  func.func @transform_6(%arg0: i32) -> (i32, i32) {
    %c0_i32 = arith.constant 0 : i32
    %c0_i32_0 = arith.constant 0 : i32
    %c0_i32_1 = arith.constant 0 : i32
    return %c0_i32, %c0_i32_0 : i32, i32
  }
  func.func @transform_7(%arg0: i32) -> (i32, i32) {
    %c0_i32 = arith.constant 0 : i32
    %c0_i32_0 = arith.constant 0 : i32
    %c0_i32_1 = arith.constant 0 : i32
    return %c0_i32, %c0_i32_0 : i32, i32
  }
  func.func @transform_8(%arg0: i32) -> (i32, i32) {
    %c0_i32 = arith.constant 0 : i32
    %c0_i32_0 = arith.constant 0 : i32
    %c0_i32_1 = arith.constant 0 : i32
    return %c0_i32, %c0_i32_0 : i32, i32
  }
  func.func @transform_9(%arg0: i32) -> (i32, i32) {
    %c0_i32 = arith.constant 0 : i32
    %c0_i32_0 = arith.constant 0 : i32
    %c0_i32_1 = arith.constant 0 : i32
    return %c0_i32, %c0_i32_0 : i32, i32
  }
  func.func @transform_10(%arg0: i32) -> (i32, i32) {
    %c0_i32 = arith.constant 0 : i32
    %c0_i32_0 = arith.constant 0 : i32
    %c0_i32_1 = arith.constant 0 : i32
    return %c0_i32, %c0_i32_0 : i32, i32
  }
  func.func @transform_11(%arg0: i32) -> (i32, i32) {
    %c0_i32 = arith.constant 0 : i32
    %c0_i32_0 = arith.constant 0 : i32
    %c0_i32_1 = arith.constant 0 : i32
    return %c0_i32, %c0_i32_0 : i32, i32
  }
  func.func @transform_12(%arg0: i32) -> (i32, i32) {
    %c0_i32 = arith.constant 0 : i32
    %c0_i32_0 = arith.constant 0 : i32
    %c0_i32_1 = arith.constant 0 : i32
    return %c0_i32, %c0_i32_0 : i32, i32
  }
  func.func @transform_13(%arg0: i32) -> (i32, i32) {
    %c0_i32 = arith.constant 0 : i32
    %c0_i32_0 = arith.constant 0 : i32
    return %arg0, %c0_i32 : i32, i32
  }
}

</mosaic_0001>

<llo_original>
// kernel: tpu_custom_call.1
$region0: #{tpu_custom_call.1}
  #allocation0 [shape = 'u32[]', space=smem, size = 0x4, offset = 0x4, fixed_abs, tag = 'smem constant byte address 0x4 - core index']
  #allocation1 [shape = 'u32[144,128]{1,0:T(1,128)}', space=vmem, size = 0x12000, scoped, tag = 'internal scratch']
  %s0 = inlined_call_operand.hbm [shape: bf16[50,64], index: 0, kind: input, shape index: {}]
  %s1 = inlined_call_operand.hbm [shape: bf16[64,128], index: 1, kind: input, shape index: {}]
  %s2 = inlined_call_operand.vmem [shape: f32[1,128], index: 2, kind: input, shape index: {}]
  %s3 = inlined_call_operand.vmem [shape: bf16[128,128], index: 3, kind: input, shape index: {}]
  %s4 = inlined_call_operand.vmem [shape: f32[1,128], index: 4, kind: input, shape index: {}]
  %s5 = inlined_call_operand.hbm [shape: bf16[128,128], index: 5, kind: input, shape index: {}]
  %s6 = inlined_call_operand.hbm [shape: f32[1,128], index: 6, kind: input, shape index: {}]
  %s7 = inlined_call_operand.hbm [shape: bf16[128,128], index: 7, kind: input, shape index: {}]
  %s8 = inlined_call_operand.hbm [shape: f32[1,128], index: 8, kind: input, shape index: {}]
  %s9 = inlined_call_operand.vmem [shape: bf16[128,128], index: 9, kind: input, shape index: {}]
  %s10 = inlined_call_operand.vmem [shape: f32[1,128], index: 10, kind: input, shape index: {}]
  %s11 = inlined_call_operand.vmem [shape: bf16[128,64], index: 11, kind: input, shape index: {}]
  %s12 = inlined_call_operand.vmem [shape: f32[1,64], index: 12, kind: input, shape index: {}]
  %s13 = inlined_call_operand.hbm [shape: bf16[50,64], index: 13, kind: output, shape index: {}]
  %s14 = sld [smem:[#allocation0]]
  $region109: #{tpu_custom_call.1} parent=0
    _
  %s16 = ssub.s32 1, %s14
  %s17 = scalar_select 0, %s16, %s14
  $region1: #{tpu_custom_call.1} parent=0
    #allocation2 [shape = 'u8[16384]{0}', space=vmem, size = 0x4000, scoped, tag = 'input window, operand 0']
    #allocation3 [shape = 's32[2]{0}', space=sflag, size = 0x8, scoped, tag = 'scoped memory for tpu_custom_call.1']
    #allocation4 [shape = 's32[2]{0}', space=sflag, size = 0x8, scoped, tag = 'scoped memory for tpu_custom_call.1']
    #allocation5 [shape = 'u8[16384]{0}', space=vmem, size = 0x4000, scoped, tag = 'input window, operand 1, single buffered']
    #allocation6 [shape = 's32[1]{0}', space=sflag, size = 0x4, scoped, tag = 'scoped memory for tpu_custom_call.1']
    #allocation7 [shape = 'u8[32768]{0}', space=vmem, size = 0x8000, scoped, tag = 'input window, operand 5, single buffered']
    #allocation8 [shape = 'u8[512]{0}', space=vmem, size = 0x400, scoped, tag = 'input window, operand 6, single buffered']
    #allocation9 [shape = 's32[1]{0}', space=sflag, size = 0x4, scoped, tag = 'scoped memory for tpu_custom_call.1']
    #allocation10 [shape = 'u8[32768]{0}', space=vmem, size = 0x8000, scoped, tag = 'input window, operand 7, single buffered']
    #allocation11 [shape = 'u8[512]{0}', space=vmem, size = 0x400, scoped, tag = 'input window, operand 8, single buffered']
    #allocation12 [shape = 's32[1]{0}', space=sflag, size = 0x4, scoped, tag = 'scoped memory for tpu_custom_call.1']
    #allocation13 [shape = 'u8[16384]{0}', space=vmem, size = 0x4000, scoped, tag = 'output window, operand 0']
    %18 = vsyncpa [#allocation3], 0
    %s19 = scalar_lea.sflag [#allocation3], 1
    %20 = vsyncpa %s19, 0
    %21 = vsyncpa [#allocation6], 0
    %22 = vsyncpa [#allocation9], 0
    %23 = vsyncpa [#allocation12], 0
    %24 = vsyncpa [#allocation4], 0
    %s25 = scalar_lea.sflag [#allocation4], 1
    %26 = vsyncpa %s25, 0
    loop: start=0, step=1, limit=4
    $region2: #{tpu_custom_call.1} parent=1 // loop_pre_header
      _
    $region3: #{tpu_custom_call.1} parent=1 // loop_header
      %s28 = sphi 0, %s32
      %p29 = scmp.ge.s32.totalorder %s28, 4
      %s38 = sphi 0, %s40
      %s41 = sphi 0, %s38
      %s42 = sphi 0, %s41
      %s58 = sphi 0, %s42
      %s62 = sphi 0, %s62
      %s64 = sphi 0, %s62
      %s65 = sphi 0, %s64
      %s79 = sphi 0, %s65
      %s83 = sphi 0, %s83
      %s85 = sphi 0, %s83
      %s86 = sphi 0, %s85
      %s100 = sphi 0, %s86
      %s104 = sphi 0, %s104
      %s106 = sphi 0, %s104
      %s107 = sphi 0, %s106
      %s121 = sphi 0, %s107
      %s125 = sphi 0, %s125
      %s127 = sphi 0, %s125
      %s128 = sphi 0, %s127
      %s142 = sphi 0, %s128
      %s146 = sphi 0, %s146
      %s148 = sphi 0, %s146
      %s149 = sphi 0, %s148
      %s163 = sphi 0, %s149
      %s167 = sphi 0, %s167
      %s169 = sphi 0, %s167
      %s170 = sphi 0, %s169
      %s184 = sphi 0, %s170
      %s188 = sphi 0, %s188
      %s190 = sphi 0, %s188
      %s191 = sphi 0, %s190
      %s205 = sphi 0, %s191
      %s209 = sphi 0, %s209
      %s211 = sphi 0, %s209
      %s212 = sphi 0, %s211
      %s226 = sphi 0, %s212
      %s230 = sphi 0, %s230
      %s232 = sphi 0, %s230
      %s233 = sphi 0, %s232
      %s247 = sphi 0, %s233
      %s251 = sphi 0, %s251
      %s253 = sphi 0, %s251
      %s254 = sphi 0, %s253
      %s268 = sphi 0, %s254
      %s272 = sphi 0, %s272
      %s274 = sphi 0, %s272
      %s275 = sphi 0, %s274
      %s289 = sphi 0, %s275
      %s293 = sphi 0, %s293
      %s295 = sphi 0, %s293
      %s296 = sphi 0, %s295
      %s310 = sphi 0, %s296
      %s316 = sphi 0, %s318
      %s319 = sphi 0, %s316
      %s320 = sphi 0, %s319
      %s336 = sphi 0, %s320
    $region4: #{tpu_custom_call.1} parent=1 // loop_header_branch
      %31 = sbr.rel (%p29) target = $region8
    $region5: #{tpu_custom_call.1} parent=1 // loop_body
      %s33 = ssub.s32 %s28, 1
      %s34 = ssub.s32 %s28, 2
      %s35 = sadd.s32 %s28, 1
      %s36 = ssub.s32 %s28, %s35
      %p37 = scmp.eq.s32.totalorder %s36, 0
      %s39 = sadd.s32 %s38, 1
      %s40 = scalar_select %p37, %s38, %s39
      %p43 = pneg %p37
      %p44 = scmp.eq.s32.totalorder %s28, 1
      %p45 = por %p43, %p44
      %p46 = scmp.ne.s32.totalorder %s38, %s41
      %p47 = scmp.eq.s32.totalorder %s28, 0
      %p48 = por %p46, %p47
      %p49 = scmp.ne.s32.totalorder %s38, %s41
      %p50 = scmp.eq.s32.totalorder %s33, 1
      %p51 = por %p49, %p50
      %p52 = scmp.ne.s32.totalorder %s41, %s42
      %p53 = scmp.eq.s32.totalorder %s33, 0
      %p54 = por %p52, %p53
      %p55 = scmp.ne.s32.totalorder %s41, %s42
      %p56 = scmp.eq.s32.totalorder %s34, 1
      %p57 = por %p55, %p56
      %p59 = scmp.ne.s32.totalorder %s42, %s58
      %p60 = scmp.eq.s32.totalorder %s34, 0
      %p61 = por %p59, %p60
      %s63 = sadd.s32 %s62, 1
      %p66 = scmp.eq.s32.totalorder %s28, 1
      %p67 = scmp.ne.s32.totalorder %s62, %s64
      %p68 = scmp.eq.s32.totalorder %s28, 0
      %p69 = por %p67, %p68
      %p70 = scmp.ne.s32.totalorder %s62, %s64
      %p71 = scmp.eq.s32.totalorder %s33, 1
      %p72 = por %p70, %p71
      %p73 = scmp.ne.s32.totalorder %s64, %s65
      %p74 = scmp.eq.s32.totalorder %s33, 0
      %p75 = por %p73, %p74
      %p76 = scmp.ne.s32.totalorder %s64, %s65
      %p77 = scmp.eq.s32.totalorder %s34, 1
      %p78 = por %p76, %p77
      %p80 = scmp.ne.s32.totalorder %s65, %s79
      %p81 = scmp.eq.s32.totalorder %s34, 0
      %p82 = por %p80, %p81
      %s84 = sadd.s32 %s83, 1
      %p87 = scmp.eq.s32.totalorder %s28, 1
      %p88 = scmp.ne.s32.totalorder %s83, %s85
      %p89 = scmp.eq.s32.totalorder %s28, 0
      %p90 = por %p88, %p89
      %p91 = scmp.ne.s32.totalorder %s83, %s85
      %p92 = scmp.eq.s32.totalorder %s33, 1
      %p93 = por %p91, %p92
      %p94 = scmp.ne.s32.totalorder %s85, %s86
      %p95 = scmp.eq.s32.totalorder %s33, 0
      %p96 = por %p94, %p95
      %p97 = scmp.ne.s32.totalorder %s85, %s86
      %p98 = scmp.eq.s32.totalorder %s34, 1
      %p99 = por %p97, %p98
      %p101 = scmp.ne.s32.totalorder %s86, %s100
      %p102 = scmp.eq.s32.totalorder %s34, 0
      %p103 = por %p101, %p102
      %s105 = sadd.s32 %s104, 1
      %p108 = scmp.eq.s32.totalorder %s28, 1
      %p109 = scmp.ne.s32.totalorder %s104, %s106
      %p110 = scmp.eq.s32.totalorder %s28, 0
      %p111 = por %p109, %p110
      %p112 = scmp.ne.s32.totalorder %s104, %s106
      %p113 = scmp.eq.s32.totalorder %s33, 1
      %p114 = por %p112, %p113
      %p115 = scmp.ne.s32.totalorder %s106, %s107
      %p116 = scmp.eq.s32.totalorder %s33, 0
      %p117 = por %p115, %p116
      %p118 = scmp.ne.s32.totalorder %s106, %s107
      %p119 = scmp.eq.s32.totalorder %s34, 1
      %p120 = por %p118, %p119
      %p122 = scmp.ne.s32.totalorder %s107, %s121
      %p123 = scmp.eq.s32.totalorder %s34, 0
      %p124 = por %p122, %p123
      %s126 = sadd.s32 %s125, 1
      %p129 = scmp.eq.s32.totalorder %s28, 1
      %p130 = scmp.ne.s32.totalorder %s125, %s127
      %p131 = scmp.eq.s32.totalorder %s28, 0
      %p132 = por %p130, %p131
      %p133 = scmp.ne.s32.totalorder %s125, %s127
      %p134 = scmp.eq.s32.totalorder %s33, 1
      %p135 = por %p133, %p134
      %p136 = scmp.ne.s32.totalorder %s127, %s128
      %p137 = scmp.eq.s32.totalorder %s33, 0
      %p138 = por %p136, %p137
      %p139 = scmp.ne.s32.totalorder %s127, %s128
      %p140 = scmp.eq.s32.totalorder %s34, 1
      %p141 = por %p139, %p140
      %p143 = scmp.ne.s32.totalorder %s128, %s142
      %p144 = scmp.eq.s32.totalorder %s34, 0
      %p145 = por %p143, %p144
      %s147 = sadd.s32 %s146, 1
      %p150 = scmp.eq.s32.totalorder %s28, 1
      %p151 = scmp.ne.s32.totalorder %s146, %s148
      %p152 = scmp.eq.s32.totalorder %s28, 0
      %p153 = por %p151, %p152
      %p154 = scmp.ne.s32.totalorder %s146, %s148
      %p155 = scmp.eq.s32.totalorder %s33, 1
      %p156 = por %p154, %p155
      %p157 = scmp.ne.s32.totalorder %s148, %s149
      %p158 = scmp.eq.s32.totalorder %s33, 0
      %p159 = por %p157, %p158
      %p160 = scmp.ne.s32.totalorder %s148, %s149
      %p161 = scmp.eq.s32.totalorder %s34, 1
      %p162 = por %p160, %p161
      %p164 = scmp.ne.s32.totalorder %s149, %s163
      %p165 = scmp.eq.s32.totalorder %s34, 0
      %p166 = por %p164, %p165
      %s168 = sadd.s32 %s167, 1
      %p171 = scmp.eq.s32.totalorder %s28, 1
      %p172 = scmp.ne.s32.totalorder %s167, %s169
      %p173 = scmp.eq.s32.totalorder %s28, 0
      %p174 = por %p172, %p173
      %p175 = scmp.ne.s32.totalorder %s167, %s169
      %p176 = scmp.eq.s32.totalorder %s33, 1
      %p177 = por %p175, %p176
      %p178 = scmp.ne.s32.totalorder %s169, %s170
      %p179 = scmp.eq.s32.totalorder %s33, 0
      %p180 = por %p178, %p179
      %p181 = scmp.ne.s32.totalorder %s169, %s170
      %p182 = scmp.eq.s32.totalorder %s34, 1
      %p183 = por %p181, %p182
      %p185 = scmp.ne.s32.totalorder %s170, %s184
      %p186 = scmp.eq.s32.totalorder %s34, 0
      %p187 = por %p185, %p186
      %s189 = sadd.s32 %s188, 1
      %p192 = scmp.eq.s32.totalorder %s28, 1
      %p193 = scmp.ne.s32.totalorder %s188, %s190
      %p194 = scmp.eq.s32.totalorder %s28, 0
      %p195 = por %p193, %p194
      %p196 = scmp.ne.s32.totalorder %s188, %s190
      %p197 = scmp.eq.s32.totalorder %s33, 1
      %p198 = por %p196, %p197
      %p199 = scmp.ne.s32.totalorder %s190, %s191
      %p200 = scmp.eq.s32.totalorder %s33, 0
      %p201 = por %p199, %p200
      %p202 = scmp.ne.s32.totalorder %s190, %s191
      %p203 = scmp.eq.s32.totalorder %s34, 1
      %p204 = por %p202, %p203
      %p206 = scmp.ne.s32.totalorder %s191, %s205
      %p207 = scmp.eq.s32.totalorder %s34, 0
      %p208 = por %p206, %p207
      %s210 = sadd.s32 %s209, 1
      %p213 = scmp.eq.s32.totalorder %s28, 1
      %p214 = scmp.ne.s32.totalorder %s209, %s211
      %p215 = scmp.eq.s32.totalorder %s28, 0
      %p216 = por %p214, %p215
      %p217 = scmp.ne.s32.totalorder %s209, %s211
      %p218 = scmp.eq.s32.totalorder %s33, 1
      %p219 = por %p217, %p218
      %p220 = scmp.ne.s32.totalorder %s211, %s212
      %p221 = scmp.eq.s32.totalorder %s33, 0
      %p222 = por %p220, %p221
      %p223 = scmp.ne.s32.totalorder %s211, %s212
      %p224 = scmp.eq.s32.totalorder %s34, 1
      %p225 = por %p223, %p224
      %p227 = scmp.ne.s32.totalorder %s212, %s226
      %p228 = scmp.eq.s32.totalorder %s34, 0
      %p229 = por %p227, %p228
      %s231 = sadd.s32 %s230, 1
      %p234 = scmp.eq.s32.totalorder %s28, 1
      %p235 = scmp.ne.s32.totalorder %s230, %s232
      %p236 = scmp.eq.s32.totalorder %s28, 0
      %p237 = por %p235, %p236
      %p238 = scmp.ne.s32.totalorder %s230, %s232
      %p239 = scmp.eq.s32.totalorder %s33, 1
      %p240 = por %p238, %p239
      %p241 = scmp.ne.s32.totalorder %s232, %s233
      %p242 = scmp.eq.s32.totalorder %s33, 0
      %p243 = por %p241, %p242
      %p244 = scmp.ne.s32.totalorder %s232, %s233
      %p245 = scmp.eq.s32.totalorder %s34, 1
      %p246 = por %p244, %p245
      %p248 = scmp.ne.s32.totalorder %s233, %s247
      %p249 = scmp.eq.s32.totalorder %s34, 0
      %p250 = por %p248, %p249
      %s252 = sadd.s32 %s251, 1
      %p255 = scmp.eq.s32.totalorder %s28, 1
      %p256 = scmp.ne.s32.totalorder %s251, %s253
      %p257 = scmp.eq.s32.totalorder %s28, 0
      %p258 = por %p256, %p257
      %p259 = scmp.ne.s32.totalorder %s251, %s253
      %p260 = scmp.eq.s32.totalorder %s33, 1
      %p261 = por %p259, %p260
      %p262 = scmp.ne.s32.totalorder %s253, %s254
      %p263 = scmp.eq.s32.totalorder %s33, 0
      %p264 = por %p262, %p263
      %p265 = scmp.ne.s32.totalorder %s253, %s254
      %p266 = scmp.eq.s32.totalorder %s34, 1
      %p267 = por %p265, %p266
      %p269 = scmp.ne.s32.totalorder %s254, %s268
      %p270 = scmp.eq.s32.totalorder %s34, 0
      %p271 = por %p269, %p270
      %s273 = sadd.s32 %s272, 1
      %p276 = scmp.eq.s32.totalorder %s28, 1
      %p277 = scmp.ne.s32.totalorder %s272, %s274
      %p278 = scmp.eq.s32.totalorder %s28, 0
      %p279 = por %p277, %p278
      %p280 = scmp.ne.s32.totalorder %s272, %s274
      %p281 = scmp.eq.s32.totalorder %s33, 1
      %p282 = por %p280, %p281
      %p283 = scmp.ne.s32.totalorder %s274, %s275
      %p284 = scmp.eq.s32.totalorder %s33, 0
      %p285 = por %p283, %p284
      %p286 = scmp.ne.s32.totalorder %s274, %s275
      %p287 = scmp.eq.s32.totalorder %s34, 1
      %p288 = por %p286, %p287
      %p290 = scmp.ne.s32.totalorder %s275, %s289
      %p291 = scmp.eq.s32.totalorder %s34, 0
      %p292 = por %p290, %p291
      %s294 = sadd.s32 %s293, 1
      %p297 = scmp.eq.s32.totalorder %s28, 1
      %p298 = scmp.ne.s32.totalorder %s293, %s295
      %p299 = scmp.eq.s32.totalorder %s28, 0
      %p300 = por %p298, %p299
      %p301 = scmp.ne.s32.totalorder %s293, %s295
      %p302 = scmp.eq.s32.totalorder %s33, 1
      %p303 = por %p301, %p302
      %p304 = scmp.ne.s32.totalorder %s295, %s296
      %p305 = scmp.eq.s32.totalorder %s33, 0
      %p306 = por %p304, %p305
      %p307 = scmp.ne.s32.totalorder %s295, %s296
      %p308 = scmp.eq.s32.totalorder %s34, 1
      %p309 = por %p307, %p308
      %p311 = scmp.ne.s32.totalorder %s296, %s310
      %p312 = scmp.eq.s32.totalorder %s34, 0
      %p313 = por %p311, %p312
      %s314 = ssub.s32 %s28, %s35
      %p315 = scmp.eq.s32.totalorder %s314, 0
      %s317 = sadd.s32 %s316, 1
      %s318 = scalar_select %p315, %s316, %s317
      %p321 = pneg %p315
      %p322 = scmp.eq.s32.totalorder %s28, 1
      %p323 = por %p321, %p322
      %p324 = scmp.ne.s32.totalorder %s316, %s319
      %p325 = scmp.eq.s32.totalorder %s28, 0
      %p326 = por %p324, %p325
      %p327 = scmp.ne.s32.totalorder %s316, %s319
      %p328 = scmp.eq.s32.totalorder %s33, 1
      %p329 = por %p327, %p328
      %p330 = scmp.ne.s32.totalorder %s319, %s320
      %p331 = scmp.eq.s32.totalorder %s33, 0
      %p332 = por %p330, %p331
      %p333 = scmp.ne.s32.totalorder %s319, %s320
      %p334 = scmp.eq.s32.totalorder %s34, 1
      %p335 = por %p333, %p334
      %p337 = scmp.ne.s32.totalorder %s320, %s336
      %p338 = scmp.eq.s32.totalorder %s34, 0
      %p339 = por %p337, %p338
      %p340 = scmp.le.s32.totalorder 1, %s28
      %p341 = scmp.lt.s32.totalorder %s28, 3
      %p342 = pnand %p340, %p341
      %p343 = pneg %p342
      // Predicated region
      $region9: #{tpu_custom_call.1} parent=5 // pred_check
        _
      $region10: #{tpu_custom_call.1} parent=5 // pred_check_branch
        %345 = sbr.rel (%p342) target = $region12
      $region11: #{tpu_custom_call.1} parent=5 // pred_region
        %s346 = ssub.s32 %s28, 1
        // Predicated region
        $region13: #{tpu_custom_call.1} parent=11 // pred_check
          %p347 = pneg %p75
        $region14: #{tpu_custom_call.1} parent=11 // pred_check_branch
          %349 = sbr.rel (%p347) target = $region16
        $region15: #{tpu_custom_call.1} parent=11 // pred_region
          %s351 = ssub.s32 512, 512
          %352 = vsyncadd [#allocation6], %s351
          %s353 = sshll.u32 [#allocation5], 4
          %s354 = int_to_ptr.vmem [resolvable:$true] %s353
          %359 = dma.hbm_to_vmem [thread:$0]  %s1, 512, %s354, [#allocation6], 64, 64, 4
        $region16: #{tpu_custom_call.1} parent=11 // pred_fallthru
          _
        // Predicated region
        $region17: #{tpu_custom_call.1} parent=11 // pred_check
          %p360 = pneg %p96
        $region18: #{tpu_custom_call.1} parent=11 // pred_check_branch
          %362 = sbr.rel (%p360) target = $region20
        $region19: #{tpu_custom_call.1} parent=11 // pred_region
          _
        $region20: #{tpu_custom_call.1} parent=11 // pred_fallthru
          _
        // Predicated region
        $region21: #{tpu_custom_call.1} parent=11 // pred_check
          %p363 = pneg %p117
        $region22: #{tpu_custom_call.1} parent=11 // pred_check_branch
          %365 = sbr.rel (%p363) target = $region24
        $region23: #{tpu_custom_call.1} parent=11 // pred_region
          _
        $region24: #{tpu_custom_call.1} parent=11 // pred_fallthru
          _
        // Predicated region
        $region25: #{tpu_custom_call.1} parent=11 // pred_check
          %p366 = pneg %p138
        $region26: #{tpu_custom_call.1} parent=11 // pred_check_branch
          %368 = sbr.rel (%p366) target = $region28
        $region27: #{tpu_custom_call.1} parent=11 // pred_region
          _
        $region28: #{tpu_custom_call.1} parent=11 // pred_fallthru
          _
        // Predicated region
        $region29: #{tpu_custom_call.1} parent=11 // pred_check
          %p369 = pneg %p159
        $region30: #{tpu_custom_call.1} parent=11 // pred_check_branch
          %371 = sbr.rel (%p369) target = $region32
        $region31: #{tpu_custom_call.1} parent=11 // pred_region
          %s373 = ssub.s32 1024, 1024
          %374 = vsyncadd [#allocation6], %s373
          %s375 = sshll.u32 [#allocation7], 4
          %s376 = int_to_ptr.vmem [resolvable:$true] %s375
          %381 = dma.hbm_to_vmem [thread:$0]  %s5, 1024, %s376, [#allocation6], 64, 64, 4
        $region32: #{tpu_custom_call.1} parent=11 // pred_fallthru
          _
        // Predicated region
        $region33: #{tpu_custom_call.1} parent=11 // pred_check
          %p382 = pneg %p180
        $region34: #{tpu_custom_call.1} parent=11 // pred_check_branch
          %384 = sbr.rel (%p382) target = $region36
        $region35: #{tpu_custom_call.1} parent=11 // pred_region
          %s386 = ssub.s32 16, 16
          %387 = vsyncadd [#allocation9], %s386
          %s389 = sshll.u32 [#allocation8], 4
          %s390 = int_to_ptr.vmem [resolvable:$true] %s389
          %392 = dma.hbm_to_vmem [thread:$0]  %s6, 16, %s390, [#allocation9]
        $region36: #{tpu_custom_call.1} parent=11 // pred_fallthru
          _
        // Predicated region
        $region37: #{tpu_custom_call.1} parent=11 // pred_check
          %p393 = pneg %p201
        $region38: #{tpu_custom_call.1} parent=11 // pred_check_branch
          %395 = sbr.rel (%p393) target = $region40
        $region39: #{tpu_custom_call.1} parent=11 // pred_region
          %s397 = ssub.s32 1024, 1024
          %398 = vsyncadd [#allocation9], %s397
          %s399 = sshll.u32 [#allocation10], 4
          %s400 = int_to_ptr.vmem [resolvable:$true] %s399
          %405 = dma.hbm_to_vmem [thread:$0]  %s7, 1024, %s400, [#allocation9], 64, 64, 4
        $region40: #{tpu_custom_call.1} parent=11 // pred_fallthru
          _
        // Predicated region
        $region41: #{tpu_custom_call.1} parent=11 // pred_check
          %p406 = pneg %p222
        $region42: #{tpu_custom_call.1} parent=11 // pred_check_branch
          %408 = sbr.rel (%p406) target = $region44
        $region43: #{tpu_custom_call.1} parent=11 // pred_region
          %s410 = ssub.s32 16, 16
          %411 = vsyncadd [#allocation12], %s410
          %s413 = sshll.u32 [#allocation11], 4
          %s414 = int_to_ptr.vmem [resolvable:$true] %s413
          %416 = dma.hbm_to_vmem [thread:$0]  %s8, 16, %s414, [#allocation12]
        $region44: #{tpu_custom_call.1} parent=11 // pred_fallthru
          _
        // Predicated region
        $region45: #{tpu_custom_call.1} parent=11 // pred_check
          %p417 = pneg %p243
        $region46: #{tpu_custom_call.1} parent=11 // pred_check_branch
          %419 = sbr.rel (%p417) target = $region48
        $region47: #{tpu_custom_call.1} parent=11 // pred_region
          _
        $region48: #{tpu_custom_call.1} parent=11 // pred_fallthru
          _
        // Predicated region
        $region49: #{tpu_custom_call.1} parent=11 // pred_check
          %p420 = pneg %p264
        $region50: #{tpu_custom_call.1} parent=11 // pred_check_branch
          %422 = sbr.rel (%p420) target = $region52
        $region51: #{tpu_custom_call.1} parent=11 // pred_region
          _
        $region52: #{tpu_custom_call.1} parent=11 // pred_fallthru
          _
        // Predicated region
        $region53: #{tpu_custom_call.1} parent=11 // pred_check
          %p423 = pneg %p285
        $region54: #{tpu_custom_call.1} parent=11 // pred_check_branch
          %425 = sbr.rel (%p423) target = $region56
        $region55: #{tpu_custom_call.1} parent=11 // pred_region
          _
        $region56: #{tpu_custom_call.1} parent=11 // pred_fallthru
          _
        // Predicated region
        $region57: #{tpu_custom_call.1} parent=11 // pred_check
          %p426 = pneg %p306
        $region58: #{tpu_custom_call.1} parent=11 // pred_check_branch
          %428 = sbr.rel (%p426) target = $region60
        $region59: #{tpu_custom_call.1} parent=11 // pred_region
          _
        $region60: #{tpu_custom_call.1} parent=11 // pred_fallthru
          _
      $region12: #{tpu_custom_call.1} parent=5 // pred_fallthru
        _
      %p429 = scmp.lt.s32.totalorder %s28, 2
      // Predicated region
      $region61: #{tpu_custom_call.1} parent=5 // pred_check
        %p430 = pneg %p429
      $region62: #{tpu_custom_call.1} parent=5 // pred_check_branch
        %432 = sbr.rel (%p430) target = $region64
      $region63: #{tpu_custom_call.1} parent=5 // pred_region
        // Predicated region
        $region65: #{tpu_custom_call.1} parent=63 // pred_check
          %p433 = pneg %p48
        $region66: #{tpu_custom_call.1} parent=63 // pred_check_branch
          %435 = sbr.rel (%p433) target = $region68
        $region67: #{tpu_custom_call.1} parent=63 // pred_region
          %s436 = sand.u32 %s38, 1
          %s437 = scalar_lea.sflag [#allocation3], %s436
          %s438 = sand.u32 %s38, 1
          %s439 = smul.addr %s438, 16
          %s440 = scalar_lea.vmem [#allocation2], %s439
          %s441 = smul.u32 4, %s28
          %s442 = ssub.s32 7, %s441
          %p443 = scmp.lt.s32.totalorder %s442, 4
          %s444 = scalar_select %p443, %s442, 4
          %s445 = smul.u32 64, %s444
          %s447 = ssub.s32 256, %s445
          %448 = vsyncadd %s437, %s447
          %p449 = scmp.ne.s32.totalorder 0, %s445
          %s450 = smul.addr %s441, 64
          %s451 = scalar_lea.hbm %s0, %s450
          %s452 = smul.u32 4, %s444
          %s453 = sshll.u32 %s440, 4
          %s454 = int_to_ptr.vmem [resolvable:$true] %s453
          %s455 = sshll.u32 %s452, 4
          %459 = dma.hbm_to_vmem [thread:$0]  (%p449), %s451, %s455, %s454, %s437, 64, 64, 4
        $region68: #{tpu_custom_call.1} parent=63 // pred_fallthru
          _
      $region64: #{tpu_custom_call.1} parent=5 // pred_fallthru
        _
      %p460 = scmp.le.s32.totalorder 1, %s28
      %p461 = scmp.lt.s32.totalorder %s28, 3
      %p462 = pnand %p460, %p461
      %p463 = pneg %p462
      // Predicated region
      $region69: #{tpu_custom_call.1} parent=5 // pred_check
        _
      $region70: #{tpu_custom_call.1} parent=5 // pred_check_branch
        %465 = sbr.rel (%p462) target = $region72
      $region71: #{tpu_custom_call.1} parent=5 // pred_region
        %s466 = ssub.s32 %s28, 1
        %s467 = sand.u32 %s41, 1
        %s468 = scalar_lea.sflag [#allocation3], %s467
        %s469 = sand.u32 %s41, 1
        %s470 = smul.addr %s469, 16
        %s471 = scalar_lea.vmem [#allocation2], %s470
        // Predicated region
        $region73: #{tpu_custom_call.1} parent=71 // pred_check
          %p472 = pneg %p54
        $region74: #{tpu_custom_call.1} parent=71 // pred_check_branch
          %474 = sbr.rel (%p472) target = $region76
        $region75: #{tpu_custom_call.1} parent=71 // pred_region
          %475 = dma.done %s468, 256
        $region76: #{tpu_custom_call.1} parent=71 // pred_fallthru
          _
        // Predicated region
        $region77: #{tpu_custom_call.1} parent=71 // pred_check
          %p476 = pneg %p75
        $region78: #{tpu_custom_call.1} parent=71 // pred_check_branch
          %478 = sbr.rel (%p476) target = $region80
        $region79: #{tpu_custom_call.1} parent=71 // pred_region
          %479 = dma.done [#allocation6], 512
        $region80: #{tpu_custom_call.1} parent=71 // pred_fallthru
          _
        // Predicated region
        $region81: #{tpu_custom_call.1} parent=71 // pred_check
          %p480 = pneg %p159
        $region82: #{tpu_custom_call.1} parent=71 // pred_check_branch
          %482 = sbr.rel (%p480) target = $region84
        $region83: #{tpu_custom_call.1} parent=71 // pred_region
          %483 = dma.done [#allocation6], 1024
        $region84: #{tpu_custom_call.1} parent=71 // pred_fallthru
          _
        // Predicated region
        $region85: #{tpu_custom_call.1} parent=71 // pred_check
          %p484 = pneg %p180
        $region86: #{tpu_custom_call.1} parent=71 // pred_check_branch
          %486 = sbr.rel (%p484) target = $region88
        $region87: #{tpu_custom_call.1} parent=71 // pred_region
          %487 = dma.done [#allocation9], 16
        $region88: #{tpu_custom_call.1} parent=71 // pred_fallthru
          _
        // Predicated region
        $region89: #{tpu_custom_call.1} parent=71 // pred_check
          %p488 = pneg %p201
        $region90: #{tpu_custom_call.1} parent=71 // pred_check_branch
          %490 = sbr.rel (%p488) target = $region92
        $region91: #{tpu_custom_call.1} parent=71 // pred_region
          %491 = dma.done [#allocation9], 1024
        $region92: #{tpu_custom_call.1} parent=71 // pred_fallthru
          _
        // Predicated region
        $region93: #{tpu_custom_call.1} parent=71 // pred_check
          %p492 = pneg %p222
        $region94: #{tpu_custom_call.1} parent=71 // pred_check_branch
          %494 = sbr.rel (%p492) target = $region96
        $region95: #{tpu_custom_call.1} parent=71 // pred_region
          %495 = dma.done [#allocation12], 16
        $region96: #{tpu_custom_call.1} parent=71 // pred_fallthru
          _
        %s496 = sand.u32 %s41, 1
        %s497 = scalar_lea.sflag [#allocation3], %s496
        %s498 = sand.u32 %s41, 1
        %s499 = smul.addr %s498, 16
        %s500 = scalar_lea.vmem [#allocation2], %s499
        %p501 = pneg %p54
        %p502 = pneg %p51
        %p503 = pneg %p75
        %p504 = pneg %p72
        %p505 = pneg %p96
        %p506 = pneg %p93
        %p507 = pneg %p117
        %p508 = pneg %p114
        %p509 = pneg %p138
        %p510 = pneg %p135
        %p511 = pneg %p159
        %p512 = pneg %p156
        %p513 = pneg %p180
        %p514 = pneg %p177
        %p515 = pneg %p201
        %p516 = pneg %p198
        %p517 = pneg %p222
        %p518 = pneg %p219
        %p519 = pneg %p243
        %p520 = pneg %p240
        %p521 = pneg %p264
        %p522 = pneg %p261
        %p523 = pneg %p285
        %p524 = pneg %p282
        %p525 = pneg %p306
        %p526 = pneg %p303
        %p527 = pneg %p332
        %p528 = pneg %p329
        %s529 = sand.u32 %s319, 1
        %s530 = scalar_lea.sflag [#allocation4], %s529
        %s531 = sand.u32 %s319, 1
        %s532 = smul.addr %s531, 16
        %s533 = scalar_lea.vmem [#allocation13], %s532
        %s534 = smul.u32 4, %s33
        %s535 = ssub.s32 7, %s534
        %p536 = scmp.lt.s32.totalorder %s535, 4
        %s537 = scalar_select %p536, %s535, 4
        %s538 = smul.u32 64, %s537
        %s539 = smul.u32 4, %s33
        %s540 = ssub.s32 7, %s539
        %p541 = scmp.lt.s32.totalorder %s540, 4
        %s542 = scalar_select %p541, %s540, 4
        %s543 = smul.u32 64, %s542
        %v545 = vld [vmem:[%s471] sm:$0xf]
        %v546 = vld [vmem:[%s471 + $0x4] sm:$0xf]
        %v547 = vld [vmem:[%s471 + $0x8] sm:$0xf]
        %v548 = vld [vmem:[%s471 + $0xc] sm:$0xf]
        %v549 = vld [vmem:[#allocation5] sm:$0xf]
        %v550 = vld [vmem:[#allocation5 + $0x4] sm:$0xf]
        %v551 = vld [vmem:[#allocation5 + $0x8] sm:$0xf]
        %v552 = vld [vmem:[#allocation5 + $0xc] sm:$0xf]
        %v553 = vld [vmem:[#allocation5 + $0x10] sm:$0xf]
        %v554 = vld [vmem:[#allocation5 + $0x14] sm:$0xf]
        %v555 = vld [vmem:[#allocation5 + $0x18] sm:$0xf]
        %v556 = vld [vmem:[#allocation5 + $0x1c] sm:$0xf]
        %v557 = vld [vmem:[%s2] sm:$0x1]
        %v559 = vlaneseq
        %v560 = vshrl.u32 %v559, 7
        %v561 = vsub.s32 0, %v560
        %v562 = vrot.slane %v557, %v561
        %v568 = vunpack.c.l.b16 %v545
        %v569 = vunpack.c.l.b16 %v546
        %v570 = vunpack.c.l.b16 %v547
        %v571 = vunpack.c.l.b16 %v548
        %v572 = vpack.c.b16 %v569, %v568
        %v573 = vpack.c.b16 %v571, %v570
        %v582 = vunpack.c.l.b16 %v549
        %v583 = vunpack.c.l.b16 %v550
        %v584 = vunpack.c.l.b16 %v551
        %v585 = vunpack.c.l.b16 %v552
        %v586 = vunpack.c.l.b16 %v553
        %v587 = vunpack.c.l.b16 %v554
        %v588 = vunpack.c.l.b16 %v555
        %v589 = vunpack.c.l.b16 %v556
        %v590 = vpack.c.b16 %v583, %v582
        %v591 = vpack.c.b16 %v585, %v584
        %v592 = vpack.c.b16 %v587, %v586
        %v593 = vpack.c.b16 %v589, %v588
        %vm598 = vcmask 523264
        %v600 = vsel %vm598, %v572, 0
        %v603 = vsel %vm598, %v573, 0
        %605 = vmatprep.subr.bf16.mxu0 0
        %606 = vmatpush1.bf16.msra.mxu0 %v590
        %607 = vmatprep.subr.bf16.mxu0 0
        %608 = vmatpush1.bf16.msra.mxu0 %v591
        %609 = vmatprep.subr.bf16.mxu0 0
        %610 = vmatpush1.bf16.msra.mxu0 %v592
        %611 = vmatprep.subr.bf16.mxu0 0
        %612 = vmatpush1.bf16.msra.mxu0 %v593
        %613 = vmatprep.subr.bf16.mxu0 0
        %614 = vmatpush1.bf16.msra.mxu0 0
        %615 = vmatprep.subr.bf16.mxu0 0
        %616 = vmatpush1.bf16.msra.mxu0 0
        %617 = vmatprep.subr.bf16.mxu0 0
        %618 = vmatpush1.bf16.msra.mxu0 0
        %619 = vmatprep.subr.bf16.mxu0 0
        %620 = vmatpush1.bf16.msra.mxu0 0
        %621 = vmatprep.subr.bf16.mxu0 0
        %622 = vmatpush1.bf16.msra.mxu0 0
        %623 = vmatprep.subr.bf16.mxu0 0
        %624 = vmatpush1.bf16.msra.mxu0 0
        %625 = vmatprep.subr.bf16.mxu0 0
        %626 = vmatpush1.bf16.msra.mxu0 0
        %627 = vmatprep.subr.bf16.mxu0 0
        %628 = vmatpush1.bf16.msra.mxu0 0
        %629 = vmatprep.subr.bf16.mxu0 0
        %630 = vmatpush1.bf16.msra.mxu0 0
        %631 = vmatprep.subr.bf16.mxu0 0
        %632 = vmatpush1.bf16.msra.mxu0 0
        %633 = vmatprep.subr.bf16.mxu0 0
        %634 = vmatpush1.bf16.msra.mxu0 0
        %635 = vmatprep.subr.bf16.mxu0 0
        %636 = vmatpush1.bf16.msra.mxu0 0
        %637 = vmatprep.mubr.bf16.mxu0 0
        %638 = vmatmul.mubr.bf16.gmra.mrb[0].mxu0 %v600
        %v639 = vpop.f32.mrb[0].mxu0
        %v640 = vadd.f32 %v562, %v639
        %v641 = vpop.f32.mrb[0].mxu0
        %v642 = vpop.f32.mrb[0].mxu0
        %v643 = vadd.f32 %v562, %v642
        %v644 = vpop.f32.mrb[0].mxu0
        %645 = vmatprep.mubr.bf16.mxu0 0
        %646 = vmatmul.mubr.bf16.gmra.mrb[0].mxu0 %v603
        %v647 = vpop.f32.mrb[0].mxu0
        %v648 = vadd.f32 %v562, %v647
        %v649 = vpop.f32.mrb[0].mxu0
        %v650 = vpop.f32.mrb[0].mxu0
        %v651 = vadd.f32 %v562, %v650
        %v652 = vpop.f32.mrb[0].mxu0
        %653 = vdwg.mxu0
        %v654 = vmax.f32 %v640, 0.0
        %v655 = vmax.f32 %v643, 0.0
        %v656 = vmax.f32 %v648, 0.0
        %v657 = vmax.f32 %v651, 0.0
        %v658 = vpack.c.bf16 %v655, %v654
        %v659 = vpack.c.bf16 %v657, %v656
        %v660 = vld [vmem:[%s3] sm:$0xf]
        %v661 = vld [vmem:[%s3 + $0x4] sm:$0xf]
        %v662 = vld [vmem:[%s3 + $0x8] sm:$0xf]
        %v663 = vld [vmem:[%s3 + $0xc] sm:$0xf]
        %v664 = vld [vmem:[%s3 + $0x10] sm:$0xf]
        %v665 = vld [vmem:[%s3 + $0x14] sm:$0xf]
        %v666 = vld [vmem:[%s3 + $0x18] sm:$0xf]
        %v667 = vld [vmem:[%s3 + $0x1c] sm:$0xf]
        %v668 = vld [vmem:[%s3 + $0x20] sm:$0xf]
        %v669 = vld [vmem:[%s3 + $0x24] sm:$0xf]
        %v670 = vld [vmem:[%s3 + $0x28] sm:$0xf]
        %v671 = vld [vmem:[%s3 + $0x2c] sm:$0xf]
        %v672 = vld [vmem:[%s3 + $0x30] sm:$0xf]
        %v673 = vld [vmem:[%s3 + $0x34] sm:$0xf]
        %v674 = vld [vmem:[%s3 + $0x38] sm:$0xf]
        %v675 = vld [vmem:[%s3 + $0x3c] sm:$0xf]
        %v676 = vld [vmem:[%s4] sm:$0x1]
        %v678 = vlaneseq
        %v679 = vshrl.u32 %v678, 7
        %v680 = vsub.s32 0, %v679
        %v681 = vrot.slane %v676, %v680
        %v699 = vunpack.c.l.b16 %v660
        %v700 = vunpack.c.l.b16 %v661
        %v701 = vunpack.c.l.b16 %v662
        %v702 = vunpack.c.l.b16 %v663
        %v703 = vunpack.c.l.b16 %v664
        %v704 = vunpack.c.l.b16 %v665
        %v705 = vunpack.c.l.b16 %v666
        %v706 = vunpack.c.l.b16 %v667
        %v707 = vunpack.c.l.b16 %v668
        %v708 = vunpack.c.l.b16 %v669
        %v709 = vunpack.c.l.b16 %v670
        %v710 = vunpack.c.l.b16 %v671
        %v711 = vunpack.c.l.b16 %v672
        %v712 = vunpack.c.l.b16 %v673
        %v713 = vunpack.c.l.b16 %v674
        %v714 = vunpack.c.l.b16 %v675
        %v715 = vpack.c.b16 %v700, %v699
        %v716 = vpack.c.b16 %v702, %v701
        %v717 = vpack.c.b16 %v704, %v703
        %v718 = vpack.c.b16 %v706, %v705
        %v719 = vpack.c.b16 %v708, %v707
        %v720 = vpack.c.b16 %v710, %v709
        %v721 = vpack.c.b16 %v712, %v711
        %v722 = vpack.c.b16 %v714, %v713
        %731 = vmatprep.subr.bf16.mxu0 0
        %732 = vmatpush1.bf16.msra.mxu0 %v715
        %733 = vmatprep.subr.bf16.mxu0 0
        %734 = vmatpush1.bf16.msra.mxu0 %v716
        %735 = vmatprep.subr.bf16.mxu0 0
        %736 = vmatpush1.bf16.msra.mxu0 %v717
        %737 = vmatprep.subr.bf16.mxu0 0
        %738 = vmatpush1.bf16.msra.mxu0 %v718
        %739 = vmatprep.subr.bf16.mxu0 0
        %740 = vmatpush1.bf16.msra.mxu0 %v719
        %741 = vmatprep.subr.bf16.mxu0 0
        %742 = vmatpush1.bf16.msra.mxu0 %v720
        %743 = vmatprep.subr.bf16.mxu0 0
        %744 = vmatpush1.bf16.msra.mxu0 %v721
        %745 = vmatprep.subr.bf16.mxu0 0
        %746 = vmatpush1.bf16.msra.mxu0 %v722
        %747 = vmatprep.subr.bf16.mxu0 0
        %748 = vmatpush1.bf16.msra.mxu0 0
        %749 = vmatprep.subr.bf16.mxu0 0
        %750 = vmatpush1.bf16.msra.mxu0 0
        %751 = vmatprep.subr.bf16.mxu0 0
        %752 = vmatpush1.bf16.msra.mxu0 0
        %753 = vmatprep.subr.bf16.mxu0 0
        %754 = vmatpush1.bf16.msra.mxu0 0
        %755 = vmatprep.subr.bf16.mxu0 0
        %756 = vmatpush1.bf16.msra.mxu0 0
        %757 = vmatprep.subr.bf16.mxu0 0
        %758 = vmatpush1.bf16.msra.mxu0 0
        %759 = vmatprep.subr.bf16.mxu0 0
        %760 = vmatpush1.bf16.msra.mxu0 0
        %761 = vmatprep.subr.bf16.mxu0 0
        %762 = vmatpush1.bf16.msra.mxu0 0
        %763 = vmatprep.mubr.bf16.mxu0 0
        %764 = vmatmul.mubr.bf16.gmra.mrb[0].mxu0 %v658
        %v765 = vpop.f32.mrb[0].mxu0
        %v766 = vadd.f32 %v681, %v765
        %v767 = vpop.f32.mrb[0].mxu0
        %v768 = vpop.f32.mrb[0].mxu0
        %v769 = vadd.f32 %v681, %v768
        %v770 = vpop.f32.mrb[0].mxu0
        %771 = vmatprep.mubr.bf16.mxu0 0
        %772 = vmatmul.mubr.bf16.gmra.mrb[0].mxu0 %v659
        %v773 = vpop.f32.mrb[0].mxu0
        %v774 = vadd.f32 %v681, %v773
        %v775 = vpop.f32.mrb[0].mxu0
        %v776 = vpop.f32.mrb[0].mxu0
        %v777 = vadd.f32 %v681, %v776
        %v778 = vpop.f32.mrb[0].mxu0
        %779 = vdwg.mxu0
        %v780 = vmax.f32 %v766, 0.0
        %v781 = vmax.f32 %v769, 0.0
        %v782 = vmax.f32 %v774, 0.0
        %v783 = vmax.f32 %v777, 0.0
        %v784 = vpack.c.bf16 %v781, %v780
        %v785 = vpack.c.bf16 %v783, %v782
        %v786 = vld [vmem:[#allocation7] sm:$0xf]
        %v787 = vld [vmem:[#allocation7 + $0x4] sm:$0xf]
        %v788 = vld [vmem:[#allocation7 + $0x8] sm:$0xf]
        %v789 = vld [vmem:[#allocation7 + $0xc] sm:$0xf]
        %v790 = vld [vmem:[#allocation7 + $0x10] sm:$0xf]
        %v791 = vld [vmem:[#allocation7 + $0x14] sm:$0xf]
        %v792 = vld [vmem:[#allocation7 + $0x18] sm:$0xf]
        %v793 = vld [vmem:[#allocation7 + $0x1c] sm:$0xf]
        %v794 = vld [vmem:[#allocation7 + $0x20] sm:$0xf]
        %v795 = vld [vmem:[#allocation7 + $0x24] sm:$0xf]
        %v796 = vld [vmem:[#allocation7 + $0x28] sm:$0xf]
        %v797 = vld [vmem:[#allocation7 + $0x2c] sm:$0xf]
        %v798 = vld [vmem:[#allocation7 + $0x30] sm:$0xf]
        %v799 = vld [vmem:[#allocation7 + $0x34] sm:$0xf]
        %v800 = vld [vmem:[#allocation7 + $0x38] sm:$0xf]
        %v801 = vld [vmem:[#allocation7 + $0x3c] sm:$0xf]
        %v802 = vld [vmem:[#allocation8] sm:$0x1]
        %v804 = vlaneseq
        %v805 = vshrl.u32 %v804, 7
        %v806 = vsub.s32 0, %v805
        %v807 = vrot.slane %v802, %v806
        %v825 = vunpack.c.l.b16 %v786
        %v826 = vunpack.c.l.b16 %v787
        %v827 = vunpack.c.l.b16 %v788
        %v828 = vunpack.c.l.b16 %v789
        %v829 = vunpack.c.l.b16 %v790
        %v830 = vunpack.c.l.b16 %v791
        %v831 = vunpack.c.l.b16 %v792
        %v832 = vunpack.c.l.b16 %v793
        %v833 = vunpack.c.l.b16 %v794
        %v834 = vunpack.c.l.b16 %v795
        %v835 = vunpack.c.l.b16 %v796
        %v836 = vunpack.c.l.b16 %v797
        %v837 = vunpack.c.l.b16 %v798
        %v838 = vunpack.c.l.b16 %v799
        %v839 = vunpack.c.l.b16 %v800
        %v840 = vunpack.c.l.b16 %v801
        %v841 = vpack.c.b16 %v826, %v825
        %v842 = vpack.c.b16 %v828, %v827
        %v843 = vpack.c.b16 %v830, %v829
        %v844 = vpack.c.b16 %v832, %v831
        %v845 = vpack.c.b16 %v834, %v833
        %v846 = vpack.c.b16 %v836, %v835
        %v847 = vpack.c.b16 %v838, %v837
        %v848 = vpack.c.b16 %v840, %v839
        %857 = vmatprep.subr.bf16.mxu0 0
        %858 = vmatpush1.bf16.msra.mxu0 %v841
        %859 = vmatprep.subr.bf16.mxu0 0
        %860 = vmatpush1.bf16.msra.mxu0 %v842
        %861 = vmatprep.subr.bf16.mxu0 0
        %862 = vmatpush1.bf16.msra.mxu0 %v843
        %863 = vmatprep.subr.bf16.mxu0 0
        %864 = vmatpush1.bf16.msra.mxu0 %v844
        %865 = vmatprep.subr.bf16.mxu0 0
        %866 = vmatpush1.bf16.msra.mxu0 %v845
        %867 = vmatprep.subr.bf16.mxu0 0
        %868 = vmatpush1.bf16.msra.mxu0 %v846
        %869 = vmatprep.subr.bf16.mxu0 0
        %870 = vmatpush1.bf16.msra.mxu0 %v847
        %871 = vmatprep.subr.bf16.mxu0 0
        %872 = vmatpush1.bf16.msra.mxu0 %v848
        %873 = vmatprep.subr.bf16.mxu0 0
        %874 = vmatpush1.bf16.msra.mxu0 0
        %875 = vmatprep.subr.bf16.mxu0 0
        %876 = vmatpush1.bf16.msra.mxu0 0
        %877 = vmatprep.subr.bf16.mxu0 0
        %878 = vmatpush1.bf16.msra.mxu0 0
        %879 = vmatprep.subr.bf16.mxu0 0
        %880 = vmatpush1.bf16.msra.mxu0 0
        %881 = vmatprep.subr.bf16.mxu0 0
        %882 = vmatpush1.bf16.msra.mxu0 0
        %883 = vmatprep.subr.bf16.mxu0 0
        %884 = vmatpush1.bf16.msra.mxu0 0
        %885 = vmatprep.subr.bf16.mxu0 0
        %886 = vmatpush1.bf16.msra.mxu0 0
        %887 = vmatprep.subr.bf16.mxu0 0
        %888 = vmatpush1.bf16.msra.mxu0 0
        %889 = vmatprep.mubr.bf16.mxu0 0
        %890 = vmatmul.mubr.bf16.gmra.mrb[0].mxu0 %v784
        %v891 = vpop.f32.mrb[0].mxu0
        %v892 = vadd.f32 %v807, %v891
        %v893 = vpop.f32.mrb[0].mxu0
        %v894 = vpop.f32.mrb[0].mxu0
        %v895 = vadd.f32 %v807, %v894
        %v896 = vpop.f32.mrb[0].mxu0
        %897 = vmatprep.mubr.bf16.mxu0 0
        %898 = vmatmul.mubr.bf16.gmra.mrb[0].mxu0 %v785
        %v899 = vpop.f32.mrb[0].mxu0
        %v900 = vadd.f32 %v807, %v899
        %v901 = vpop.f32.mrb[0].mxu0
        %v902 = vpop.f32.mrb[0].mxu0
        %v903 = vadd.f32 %v807, %v902
        %v904 = vpop.f32.mrb[0].mxu0
        %905 = vdwg.mxu0
        %v906 = vmax.f32 %v892, 0.0
        %v907 = vmax.f32 %v895, 0.0
        %v908 = vmax.f32 %v900, 0.0
        %v909 = vmax.f32 %v903, 0.0
        %v910 = vpack.c.bf16 %v907, %v906
        %v911 = vpack.c.bf16 %v909, %v908
        %v912 = vld [vmem:[#allocation10] sm:$0xf]
        %v913 = vld [vmem:[#allocation10 + $0x4] sm:$0xf]
        %v914 = vld [vmem:[#allocation10 + $0x8] sm:$0xf]
        %v915 = vld [vmem:[#allocation10 + $0xc] sm:$0xf]
        %v916 = vld [vmem:[#allocation10 + $0x10] sm:$0xf]
        %v917 = vld [vmem:[#allocation10 + $0x14] sm:$0xf]
        %v918 = vld [vmem:[#allocation10 + $0x18] sm:$0xf]
        %v919 = vld [vmem:[#allocation10 + $0x1c] sm:$0xf]
        %v920 = vld [vmem:[#allocation10 + $0x20] sm:$0xf]
        %v921 = vld [vmem:[#allocation10 + $0x24] sm:$0xf]
        %v922 = vld [vmem:[#allocation10 + $0x28] sm:$0xf]
        %v923 = vld [vmem:[#allocation10 + $0x2c] sm:$0xf]
        %v924 = vld [vmem:[#allocation10 + $0x30] sm:$0xf]
        %v925 = vld [vmem:[#allocation10 + $0x34] sm:$0xf]
        %v926 = vld [vmem:[#allocation10 + $0x38] sm:$0xf]
        %v927 = vld [vmem:[#allocation10 + $0x3c] sm:$0xf]
        %v928 = vld [vmem:[#allocation11] sm:$0x1]
        %v930 = vlaneseq
        %v931 = vshrl.u32 %v930, 7
        %v932 = vsub.s32 0, %v931
        %v933 = vrot.slane %v928, %v932
        %v951 = vunpack.c.l.b16 %v912
        %v952 = vunpack.c.l.b16 %v913
        %v953 = vunpack.c.l.b16 %v914
        %v954 = vunpack.c.l.b16 %v915
        %v955 = vunpack.c.l.b16 %v916
        %v956 = vunpack.c.l.b16 %v917
        %v957 = vunpack.c.l.b16 %v918
        %v958 = vunpack.c.l.b16 %v919
        %v959 = vunpack.c.l.b16 %v920
        %v960 = vunpack.c.l.b16 %v921
        %v961 = vunpack.c.l.b16 %v922
        %v962 = vunpack.c.l.b16 %v923
        %v963 = vunpack.c.l.b16 %v924
        %v964 = vunpack.c.l.b16 %v925
        %v965 = vunpack.c.l.b16 %v926
        %v966 = vunpack.c.l.b16 %v927
        %v967 = vpack.c.b16 %v952, %v951
        %v968 = vpack.c.b16 %v954, %v953
        %v969 = vpack.c.b16 %v956, %v955
        %v970 = vpack.c.b16 %v958, %v957
        %v971 = vpack.c.b16 %v960, %v959
        %v972 = vpack.c.b16 %v962, %v961
        %v973 = vpack.c.b16 %v964, %v963
        %v974 = vpack.c.b16 %v966, %v965
        %983 = vmatprep.subr.bf16.mxu0 0
        %984 = vmatpush1.bf16.msra.mxu0 %v967
        %985 = vmatprep.subr.bf16.mxu0 0
        %986 = vmatpush1.bf16.msra.mxu0 %v968
        %987 = vmatprep.subr.bf16.mxu0 0
        %988 = vmatpush1.bf16.msra.mxu0 %v969
        %989 = vmatprep.subr.bf16.mxu0 0
        %990 = vmatpush1.bf16.msra.mxu0 %v970
        %991 = vmatprep.subr.bf16.mxu0 0
        %992 = vmatpush1.bf16.msra.mxu0 %v971
        %993 = vmatprep.subr.bf16.mxu0 0
        %994 = vmatpush1.bf16.msra.mxu0 %v972
        %995 = vmatprep.subr.bf16.mxu0 0
        %996 = vmatpush1.bf16.msra.mxu0 %v973
        %997 = vmatprep.subr.bf16.mxu0 0
        %998 = vmatpush1.bf16.msra.mxu0 %v974
        %999 = vmatprep.subr.bf16.mxu0 0
        %1000 = vmatpush1.bf16.msra.mxu0 0
        %1001 = vmatprep.subr.bf16.mxu0 0
        %1002 = vmatpush1.bf16.msra.mxu0 0
        %1003 = vmatprep.subr.bf16.mxu0 0
        %1004 = vmatpush1.bf16.msra.mxu0 0
        %1005 = vmatprep.subr.bf16.mxu0 0
        %1006 = vmatpush1.bf16.msra.mxu0 0
        %1007 = vmatprep.subr.bf16.mxu0 0
        %1008 = vmatpush1.bf16.msra.mxu0 0
        %1009 = vmatprep.subr.bf16.mxu0 0
        %1010 = vmatpush1.bf16.msra.mxu0 0
        %1011 = vmatprep.subr.bf16.mxu0 0
        %1012 = vmatpush1.bf16.msra.mxu0 0
        %1013 = vmatprep.subr.bf16.mxu0 0
        %1014 = vmatpush1.bf16.msra.mxu0 0
        %1015 = vmatprep.mubr.bf16.mxu0 0
        %1016 = vmatmul.mubr.bf16.gmra.mrb[0].mxu0 %v910
        %v1017 = vpop.f32.mrb[0].mxu0
        %v1018 = vadd.f32 %v933, %v1017
        %v1019 = vpop.f32.mrb[0].mxu0
        %v1020 = vpop.f32.mrb[0].mxu0
        %v1021 = vadd.f32 %v933, %v1020
        %v1022 = vpop.f32.mrb[0].mxu0
        %1023 = vmatprep.mubr.bf16.mxu0 0
        %1024 = vmatmul.mubr.bf16.gmra.mrb[0].mxu0 %v911
        %v1025 = vpop.f32.mrb[0].mxu0
        %v1026 = vadd.f32 %v933, %v1025
        %v1027 = vpop.f32.mrb[0].mxu0
        %v1028 = vpop.f32.mrb[0].mxu0
        %v1029 = vadd.f32 %v933, %v1028
        %v1030 = vpop.f32.mrb[0].mxu0
        %1031 = vdwg.mxu0
        %v1032 = vmax.f32 %v1018, 0.0
        %v1033 = vmax.f32 %v1021, 0.0
        %v1034 = vmax.f32 %v1026, 0.0
        %v1035 = vmax.f32 %v1029, 0.0
        %v1036 = vpack.c.bf16 %v1033, %v1032
        %v1037 = vpack.c.bf16 %v1035, %v1034
        %v1038 = vld [vmem:[%s9] sm:$0xf]
        %v1039 = vld [vmem:[%s9 + $0x4] sm:$0xf]
        %v1040 = vld [vmem:[%s9 + $0x8] sm:$0xf]
        %v1041 = vld [vmem:[%s9 + $0xc] sm:$0xf]
        %v1042 = vld [vmem:[%s9 + $0x10] sm:$0xf]
        %v1043 = vld [vmem:[%s9 + $0x14] sm:$0xf]
        %v1044 = vld [vmem:[%s9 + $0x18] sm:$0xf]
        %v1045 = vld [vmem:[%s9 + $0x1c] sm:$0xf]
        %v1046 = vld [vmem:[%s9 + $0x20] sm:$0xf]
        %v1047 = vld [vmem:[%s9 + $0x24] sm:$0xf]
        %v1048 = vld [vmem:[%s9 + $0x28] sm:$0xf]
        %v1049 = vld [vmem:[%s9 + $0x2c] sm:$0xf]
        %v1050 = vld [vmem:[%s9 + $0x30] sm:$0xf]
        %v1051 = vld [vmem:[%s9 + $0x34] sm:$0xf]
        %v1052 = vld [vmem:[%s9 + $0x38] sm:$0xf]
        %v1053 = vld [vmem:[%s9 + $0x3c] sm:$0xf]
        %v1054 = vld [vmem:[%s10] sm:$0x1]
        %v1056 = vlaneseq
        %v1057 = vshrl.u32 %v1056, 7
        %v1058 = vsub.s32 0, %v1057
        %v1059 = vrot.slane %v1054, %v1058
        %v1077 = vunpack.c.l.b16 %v1038
        %v1078 = vunpack.c.l.b16 %v1039
        %v1079 = vunpack.c.l.b16 %v1040
        %v1080 = vunpack.c.l.b16 %v1041
        %v1081 = vunpack.c.l.b16 %v1042
        %v1082 = vunpack.c.l.b16 %v1043
        %v1083 = vunpack.c.l.b16 %v1044
        %v1084 = vunpack.c.l.b16 %v1045
        %v1085 = vunpack.c.l.b16 %v1046
        %v1086 = vunpack.c.l.b16 %v1047
        %v1087 = vunpack.c.l.b16 %v1048
        %v1088 = vunpack.c.l.b16 %v1049
        %v1089 = vunpack.c.l.b16 %v1050
        %v1090 = vunpack.c.l.b16 %v1051
        %v1091 = vunpack.c.l.b16 %v1052
        %v1092 = vunpack.c.l.b16 %v1053
        %v1093 = vpack.c.b16 %v1078, %v1077
        %v1094 = vpack.c.b16 %v1080, %v1079
        %v1095 = vpack.c.b16 %v1082, %v1081
        %v1096 = vpack.c.b16 %v1084, %v1083
        %v1097 = vpack.c.b16 %v1086, %v1085
        %v1098 = vpack.c.b16 %v1088, %v1087
        %v1099 = vpack.c.b16 %v1090, %v1089
        %v1100 = vpack.c.b16 %v1092, %v1091
        %1109 = vmatprep.subr.bf16.mxu0 0
        %1110 = vmatpush1.bf16.msra.mxu0 %v1093
        %1111 = vmatprep.subr.bf16.mxu0 0
        %1112 = vmatpush1.bf16.msra.mxu0 %v1094
        %1113 = vmatprep.subr.bf16.mxu0 0
        %1114 = vmatpush1.bf16.msra.mxu0 %v1095
        %1115 = vmatprep.subr.bf16.mxu0 0
        %1116 = vmatpush1.bf16.msra.mxu0 %v1096
        %1117 = vmatprep.subr.bf16.mxu0 0
        %1118 = vmatpush1.bf16.msra.mxu0 %v1097
        %1119 = vmatprep.subr.bf16.mxu0 0
        %1120 = vmatpush1.bf16.msra.mxu0 %v1098
        %1121 = vmatprep.subr.bf16.mxu0 0
        %1122 = vmatpush1.bf16.msra.mxu0 %v1099
        %1123 = vmatprep.subr.bf16.mxu0 0
        %1124 = vmatpush1.bf16.msra.mxu0 %v1100
        %1125 = vmatprep.subr.bf16.mxu0 0
        %1126 = vmatpush1.bf16.msra.mxu0 0
        %1127 = vmatprep.subr.bf16.mxu0 0
        %1128 = vmatpush1.bf16.msra.mxu0 0
        %1129 = vmatprep.subr.bf16.mxu0 0
        %1130 = vmatpush1.bf16.msra.mxu0 0
        %1131 = vmatprep.subr.bf16.mxu0 0
        %1132 = vmatpush1.bf16.msra.mxu0 0
        %1133 = vmatprep.subr.bf16.mxu0 0
        %1134 = vmatpush1.bf16.msra.mxu0 0
        %1135 = vmatprep.subr.bf16.mxu0 0
        %1136 = vmatpush1.bf16.msra.mxu0 0
        %1137 = vmatprep.subr.bf16.mxu0 0
        %1138 = vmatpush1.bf16.msra.mxu0 0
        %1139 = vmatprep.subr.bf16.mxu0 0
        %1140 = vmatpush1.bf16.msra.mxu0 0
        %1141 = vmatprep.mubr.bf16.mxu0 0
        %1142 = vmatmul.mubr.bf16.gmra.mrb[0].mxu0 %v1036
        %v1143 = vpop.f32.mrb[0].mxu0
        %v1144 = vadd.f32 %v1059, %v1143
        %v1145 = vpop.f32.mrb[0].mxu0
        %v1146 = vpop.f32.mrb[0].mxu0
        %v1147 = vadd.f32 %v1059, %v1146
        %v1148 = vpop.f32.mrb[0].mxu0
        %1149 = vmatprep.mubr.bf16.mxu0 0
        %1150 = vmatmul.mubr.bf16.gmra.mrb[0].mxu0 %v1037
        %v1151 = vpop.f32.mrb[0].mxu0
        %v1152 = vadd.f32 %v1059, %v1151
        %v1153 = vpop.f32.mrb[0].mxu0
        %v1154 = vpop.f32.mrb[0].mxu0
        %v1155 = vadd.f32 %v1059, %v1154
        %v1156 = vpop.f32.mrb[0].mxu0
        %1157 = vdwg.mxu0
        %v1158 = vmax.f32 %v1144, 0.0
        %v1159 = vmax.f32 %v1147, 0.0
        %v1160 = vmax.f32 %v1152, 0.0
        %v1161 = vmax.f32 %v1155, 0.0
        %v1162 = vpack.c.bf16 %v1159, %v1158
        %v1163 = vpack.c.bf16 %v1161, %v1160
        %v1164 = vld [vmem:[%s11] sm:$0xf]
        %v1165 = vld [vmem:[%s11 + $0x4] sm:$0xf]
        %v1166 = vld [vmem:[%s11 + $0x8] sm:$0xf]
        %v1167 = vld [vmem:[%s11 + $0xc] sm:$0xf]
        %v1168 = vld [vmem:[%s11 + $0x10] sm:$0xf]
        %v1169 = vld [vmem:[%s11 + $0x14] sm:$0xf]
        %v1170 = vld [vmem:[%s11 + $0x18] sm:$0xf]
        %v1171 = vld [vmem:[%s11 + $0x1c] sm:$0xf]
        %v1172 = vld [vmem:[%s11 + $0x20] sm:$0xf]
        %v1173 = vld [vmem:[%s11 + $0x24] sm:$0xf]
        %v1174 = vld [vmem:[%s11 + $0x28] sm:$0xf]
        %v1175 = vld [vmem:[%s11 + $0x2c] sm:$0xf]
        %v1176 = vld [vmem:[%s11 + $0x30] sm:$0xf]
        %v1177 = vld [vmem:[%s11 + $0x34] sm:$0xf]
        %v1178 = vld [vmem:[%s11 + $0x38] sm:$0xf]
        %v1179 = vld [vmem:[%s11 + $0x3c] sm:$0xf]
        %v1180 = vld [vmem:[%s12] sm:$0x1]
        %v1182 = vlaneseq
        %v1183 = vshrl.u32 %v1182, 7
        %v1184 = vsub.s32 0, %v1183
        %v1185 = vrot.slane %v1180, %v1184
        %v1203 = vunpack.c.l.b16 %v1164
        %v1204 = vunpack.c.l.b16 %v1165
        %v1205 = vunpack.c.l.b16 %v1166
        %v1206 = vunpack.c.l.b16 %v1167
        %v1207 = vunpack.c.l.b16 %v1168
        %v1208 = vunpack.c.l.b16 %v1169
        %v1209 = vunpack.c.l.b16 %v1170
        %v1210 = vunpack.c.l.b16 %v1171
        %v1211 = vunpack.c.l.b16 %v1172
        %v1212 = vunpack.c.l.b16 %v1173
        %v1213 = vunpack.c.l.b16 %v1174
        %v1214 = vunpack.c.l.b16 %v1175
        %v1215 = vunpack.c.l.b16 %v1176
        %v1216 = vunpack.c.l.b16 %v1177
        %v1217 = vunpack.c.l.b16 %v1178
        %v1218 = vunpack.c.l.b16 %v1179
        %v1219 = vpack.c.b16 %v1204, %v1203
        %v1220 = vpack.c.b16 %v1206, %v1205
        %v1221 = vpack.c.b16 %v1208, %v1207
        %v1222 = vpack.c.b16 %v1210, %v1209
        %v1223 = vpack.c.b16 %v1212, %v1211
        %v1224 = vpack.c.b16 %v1214, %v1213
        %v1225 = vpack.c.b16 %v1216, %v1215
        %v1226 = vpack.c.b16 %v1218, %v1217
        %1235 = vmatprep.subr.bf16.mxu0 0
        %1236 = vmatpush1.bf16.msra.mxu0 %v1219
        %1237 = vmatprep.subr.bf16.mxu0 0
        %1238 = vmatpush1.bf16.msra.mxu0 %v1220
        %1239 = vmatprep.subr.bf16.mxu0 0
        %1240 = vmatpush1.bf16.msra.mxu0 %v1221
        %1241 = vmatprep.subr.bf16.mxu0 0
        %1242 = vmatpush1.bf16.msra.mxu0 %v1222
        %1243 = vmatprep.subr.bf16.mxu0 0
        %1244 = vmatpush1.bf16.msra.mxu0 %v1223
        %1245 = vmatprep.subr.bf16.mxu0 0
        %1246 = vmatpush1.bf16.msra.mxu0 %v1224
        %1247 = vmatprep.subr.bf16.mxu0 0
        %1248 = vmatpush1.bf16.msra.mxu0 %v1225
        %1249 = vmatprep.subr.bf16.mxu0 0
        %1250 = vmatpush1.bf16.msra.mxu0 %v1226
        %1251 = vmatprep.subr.bf16.mxu0 0
        %1252 = vmatpush1.bf16.msra.mxu0 0
        %1253 = vmatprep.subr.bf16.mxu0 0
        %1254 = vmatpush1.bf16.msra.mxu0 0
        %1255 = vmatprep.subr.bf16.mxu0 0
        %1256 = vmatpush1.bf16.msra.mxu0 0
        %1257 = vmatprep.subr.bf16.mxu0 0
        %1258 = vmatpush1.bf16.msra.mxu0 0
        %1259 = vmatprep.subr.bf16.mxu0 0
        %1260 = vmatpush1.bf16.msra.mxu0 0
        %1261 = vmatprep.subr.bf16.mxu0 0
        %1262 = vmatpush1.bf16.msra.mxu0 0
        %1263 = vmatprep.subr.bf16.mxu0 0
        %1264 = vmatpush1.bf16.msra.mxu0 0
        %1265 = vmatprep.subr.bf16.mxu0 0
        %1266 = vmatpush1.bf16.msra.mxu0 0
        %1267 = vmatprep.mubr.bf16.mxu0 0
        %1268 = vmatmul.mubr.bf16.gmra.mrb[0].mxu0 %v1162
        %v1269 = vpop.f32.mrb[0].mxu0
        %v1270 = vadd.f32 %v1185, %v1269
        %v1271 = vpop.f32.mrb[0].mxu0
        %v1272 = vpop.f32.mrb[0].mxu0
        %v1273 = vadd.f32 %v1185, %v1272
        %v1274 = vpop.f32.mrb[0].mxu0
        %1275 = vmatprep.mubr.bf16.mxu0 0
        %1276 = vmatmul.mubr.bf16.gmra.mrb[0].mxu0 %v1163
        %v1277 = vpop.f32.mrb[0].mxu0
        %v1278 = vadd.f32 %v1185, %v1277
        %v1279 = vpop.f32.mrb[0].mxu0
        %v1280 = vpop.f32.mrb[0].mxu0
        %v1281 = vadd.f32 %v1185, %v1280
        %v1282 = vpop.f32.mrb[0].mxu0
        %1283 = vdwg.mxu0
        %v1284 = vmul.f32 %v1270, 0.5
        %v1285 = vmul.f32 %v1273, 0.5
        %v1286 = vmul.f32 %v1278, 0.5
        %v1287 = vmul.f32 %v1281, 0.5
        %v1288 = vtanh.pop %v1284
        %v1289 = vtanh.pop %v1285
        %v1290 = vtanh.pop %v1286
        %v1291 = vtanh.pop %v1287
        %v1292 = vadd.f32 %v1288, 1.0
        %v1293 = vadd.f32 %v1289, 1.0
        %v1294 = vadd.f32 %v1290, 1.0
        %v1295 = vadd.f32 %v1291, 1.0
        %v1296 = vmul.f32 %v1292, 0.5
        %v1297 = vmul.f32 %v1293, 0.5
        %v1298 = vmul.f32 %v1294, 0.5
        %v1299 = vmul.f32 %v1295, 0.5
        %v1300 = vpack.c.bf16 %v1297, %v1296
        %v1301 = vpack.c.bf16 %v1299, %v1298
        %v1304 = vunpack.c.l.b16 %v1300
        %v1305 = vunpack.c.h.b16 %v1300
        %v1306 = vunpack.c.l.b16 %v1301
        %v1307 = vunpack.c.h.b16 %v1301
        %v1308 = vpack.c.b16 %v1304, %v1304
        %v1309 = vpack.c.b16 %v1305, %v1305
        %v1310 = vpack.c.b16 %v1306, %v1306
        %v1311 = vpack.c.b16 %v1307, %v1307
        %vm1316 = vcmask 519168
        %1317 = vst.msk [vmem:[%s533] sm:$0xf] %vm1316, %v1308
        %1318 = vst.msk [vmem:[%s533 + $0x4] sm:$0xf] %vm1316, %v1309
        %1319 = vst.msk [vmem:[%s533 + $0x8] sm:$0xf] %vm1316, %v1310
        %1320 = vst.msk [vmem:[%s533 + $0xc] sm:$0xf] %vm1316, %v1311
        %s1321 = sand.u32 %s319, 1
        %s1322 = scalar_lea.sflag [#allocation4], %s1321
        %s1323 = sand.u32 %s319, 1
        %s1324 = smul.addr %s1323, 16
        %s1325 = scalar_lea.vmem [#allocation13], %s1324
        // Predicated region
        $region97: #{tpu_custom_call.1} parent=71 // pred_check
          %p1326 = pneg %p329
        $region98: #{tpu_custom_call.1} parent=71 // pred_check_branch
          %1328 = sbr.rel (%p1326) target = $region100
        $region99: #{tpu_custom_call.1} parent=71 // pred_region
          %s1329 = smul.u32 4, %s33
          %s1330 = ssub.s32 7, %s1329
          %p1331 = scmp.lt.s32.totalorder %s1330, 4
          %s1332 = scalar_select %p1331, %s1330, 4
          %s1333 = smul.u32 64, %s1332
          %s1335 = ssub.s32 256, %s1333
          %1336 = vsyncadd %s1322, %s1335
          %p1337 = scmp.ne.s32.totalorder 0, %s1333
          %s1338 = smul.addr %s1329, 64
          %s1339 = scalar_lea.hbm %s13, %s1338
          %s1340 = smul.u32 4, %s1332
          %s1341 = sshll.u32 %s1325, 4
          %s1342 = int_to_ptr.vmem [resolvable:$true] %s1341
          %s1343 = sshll.u32 %s1340, 4
          %1347 = dma.vmem_to_hbm [thread:$0]  (%p1337), %s1342, %s1343, %s1339, %s1322, 64, 64, 4
        $region100: #{tpu_custom_call.1} parent=71 // pred_fallthru
          _
      $region72: #{tpu_custom_call.1} parent=5 // pred_fallthru
        _
      %p1348 = scmp.le.s32.totalorder 2, %s28
      // Predicated region
      $region101: #{tpu_custom_call.1} parent=5 // pred_check
        %p1349 = pneg %p1348
      $region102: #{tpu_custom_call.1} parent=5 // pred_check_branch
        %1351 = sbr.rel (%p1349) target = $region104
      $region103: #{tpu_custom_call.1} parent=5 // pred_region
        %s1352 = ssub.s32 %s28, 2
        // Predicated region
        $region105: #{tpu_custom_call.1} parent=103 // pred_check
          %p1353 = pneg %p335
        $region106: #{tpu_custom_call.1} parent=103 // pred_check_branch
          %1355 = sbr.rel (%p1353) target = $region108
        $region107: #{tpu_custom_call.1} parent=103 // pred_region
          %s1356 = sand.u32 %s320, 1
          %s1357 = scalar_lea.sflag [#allocation4], %s1356
          %s1358 = sand.u32 %s320, 1
          %s1359 = smul.addr %s1358, 16
          %s1360 = scalar_lea.vmem [#allocation13], %s1359
          %1361 = dma.done %s1357, 256
        $region108: #{tpu_custom_call.1} parent=103 // pred_fallthru
          _
      $region104: #{tpu_custom_call.1} parent=5 // pred_fallthru
        _
    $region6: #{tpu_custom_call.1} parent=1 // loop_footer
      %s32 = sadd.s32 1, %s28
    $region7: #{tpu_custom_call.1} parent=1 // loop_footer_branch
      %27 = sbr.rel target = $region3
    $region8: #{tpu_custom_call.1} parent=1 // loop_exit
      _
    %1362 = vsyncpa [#allocation3], 1
    %s1363 = scalar_lea.sflag [#allocation3], 1
    %1364 = vsyncpa %s1363, 1
    %1365 = vsyncpa [#allocation6], 1
    %1366 = vsyncpa [#allocation9], 1
    %1367 = vsyncpa [#allocation12], 1
    %1368 = vsyncpa [#allocation4], 1
    %s1369 = scalar_lea.sflag [#allocation4], 1
    %1370 = vsyncpa %s1369, 1

</llo_original>
